<compile_context>
chip_gen: v6e
topology: v6e:2x2x1
jax: 0.10.0
libtpu: 0.0.40
codegen_flags: <defaults>
</compile_context>

<pallas_src>
import jax
import jax.numpy as jnp
from jax import lax
from jax.experimental import pallas as pl
from jax.experimental.pallas import tpu as pltpu


def decoder_step_kernel(
    emb_ref, hid_ref, enc_ref, encp_ref, mask_ref,
    aWh_ref, av_ref, Wih_ref, Whh_ref, bgi_ref, bghn_ref, fcW_ref, fcb_ref,
    pred_ref, hnew_ref, attn_ref,
):
    f32 = jnp.float32
    bf16 = jnp.bfloat16

    emb = emb_ref[0]        # [1, E]  f32
    hid = hid_ref[0]        # [1, H]  f32
    enc = enc_ref[0]        # [S, E2] f32
    encp = encp_ref[0]      # [S, H]  f32  (enc @ W_e + b_attn, precomputed once per sequence)
    mask = mask_ref[0]      # [1, S]  f32

    H = hid.shape[-1]

    # ---------------- attention ----------------
    # energy = tanh(hidden @ W_h  +  (enc @ W_e + b)[precomputed])
    e_h = jnp.dot(hid.astype(bf16), aWh_ref[...], preferred_element_type=f32)      # [1, H]
    energy = jnp.tanh(encp + e_h)                                                   # [S, H] f32
    # scores = v . energy on the MXU:  [1,H] x [S,H]^T -> [1,S]
    scores = lax.dot_general(av_ref[...], energy.astype(bf16),
                             (((1,), (1,)), ((), ())),
                             preferred_element_type=f32)                            # [1, S]
    scores = jnp.where(mask == 0.0, -1e10, scores)
    scores = scores - jnp.max(scores, axis=-1, keepdims=True)
    p = jnp.exp(scores)
    a = p * pl.reciprocal(jnp.sum(p, axis=-1, keepdims=True), approx=True)          # [1, S]
    attn_ref[0] = a

    # ---------------- weighted context: a @ enc (MXU) ----------------
    weighted = jnp.dot(a, enc, preferred_element_type=f32)                          # [1, E2]

    # ---------------- single-step GRU, x = cat(emb, weighted), merged weight ----------------
    x = jnp.concatenate([emb, weighted], axis=-1).astype(bf16)                      # [1, E+E2]
    gi = jnp.dot(x, Wih_ref[...], preferred_element_type=f32) + bgi_ref[...]        # [1, 3H]
    gh = jnp.dot(hid.astype(bf16), Whh_ref[...], preferred_element_type=f32)        # [1, 3H]
    r = jax.nn.sigmoid(gi[:, 0:H] + gh[:, 0:H])
    z = jax.nn.sigmoid(gi[:, H:2 * H] + gh[:, H:2 * H])
    n = jnp.tanh(gi[:, 2 * H:3 * H] + r * (gh[:, 2 * H:3 * H] + bghn_ref[...]))
    h_new = (1.0 - z) * n + z * hid                                                 # [1, H] f32
    hnew_ref[0] = h_new

    # ---------------- fc on cat(output, weighted, embedded), merged weight ----------------
    row = jnp.concatenate([h_new, weighted, emb], axis=-1).astype(bf16)             # [1, H+E2+E]
    pred_ref[0] = jnp.dot(row, fcW_ref[...], preferred_element_type=f32) + fcb_ref[...]


def prepare_decoder_params(p):
    """One-time (per model) weight prep: merge concat-split matmuls, fold biases, cast MXU
    weight operands to bf16 (elementwise biases stay f32)."""
    H = p["Whh"].shape[0]
    bf16 = jnp.bfloat16
    # Fold bhh for the r/z gates into the GRU input bias; keep bhh_n separate (it is scaled by r).
    b_gi = p["bih"] + jnp.concatenate(
        [p["bhh"][:, :2 * H], jnp.zeros_like(p["bhh"][:, 2 * H:])], axis=-1)
    return dict(
        embedding=p["embedding"],
        aWe=p["aWe"], ab=p["ab"],                                        # encoder-side precompute only
        aWh=p["aWh"].astype(bf16),                                       # [H, H]
        av=p["av"].astype(bf16),                                         # [1, H]
        Wih=jnp.concatenate([p["WihE"], p["WihW"]], axis=0).astype(bf16),    # [E+E2, 3H]
        Whh=p["Whh"].astype(bf16),                                       # [H, 3H]
        b_gi=b_gi,                                                       # [1, 3H] f32
        b_ghn=p["bhh"][:, 2 * H:],                                       # [1, H]  f32
        fcW=jnp.concatenate([p["fcWh"], p["fcWw"], p["fcWe"]], axis=0).astype(bf16),  # [H+E2+E, O]
        fcb=p["fcb"],                                                    # [1, O] f32
    )


def precompute_encoder_context(encoder_outputs, prep):
    """Once per source sequence (NOT per decode step): permute encoder outputs to batch-major
    and compute the attention energy projection enc @ W_e + b, hoisting the dominant matmul and
    the transpose out of the per-step kernel."""
    enc_bm = jnp.transpose(encoder_outputs, (1, 0, 2))                                 # [B, S, E2]
    enc_proj = jnp.einsum("bse,eh->bsh", enc_bm, prep["aWe"]) + prep["ab"][None]       # [B, S, H]
    return enc_bm, enc_proj


def decoder_step(trg_last, hidden, enc_bm, enc_proj, mask, prep):
    """Per decode step. trg_last: [B] int32, hidden: [B,H], enc_bm: [B,S,E2], enc_proj: [B,S,H]."""
    B, S, E2 = enc_bm.shape
    H = hidden.shape[-1]
    E = prep["embedding"].shape[-1]
    O = prep["fcb"].shape[-1]

    emb = prep["embedding"][trg_last][:, None, :]        # [B, 1, E]  (dropout = eval-mode identity)
    hid3 = hidden[:, None, :]                            # [B, 1, H]
    mask3 = mask.astype(jnp.float32)[:, None, :]         # [B, 1, S]

    def batch3(shape):
        return pl.BlockSpec(shape, lambda b: (b, 0, 0))

    def weight2(shape):
        # Constant index_map -> weight block stays VMEM-resident across grid iterations.
        return pl.BlockSpec(shape, lambda b: (0, 0))

    preds, h_new, attn = pl.pallas_call(
        decoder_step_kernel,
        grid=(B,),
        in_specs=[
            batch3((1, 1, E)),            # emb
            batch3((1, 1, H)),            # hidden
            batch3((1, S, E2)),           # encoder outputs (batch-major)
            batch3((1, S, H)),            # precomputed attention projection
            batch3((1, 1, S)),            # mask
            weight2((H, H)),              # aWh
            weight2((1, H)),              # av
            weight2((E + E2, 3 * H)),     # Wih (merged)
            weight2((H, 3 * H)),          # Whh
            weight2((1, 3 * H)),          # b_gi (folded)
            weight2((1, H)),              # b_ghn
            weight2((H + E2 + E, O)),     # fcW (merged)
            weight2((1, O)),              # fcb
        ],
        out_specs=(batch3((1, 1, O)), batch3((1, 1, H)), batch3((1, 1, S))),
        out_shape=(
            jax.ShapeDtypeStruct((B, 1, O), jnp.float32),   # predictions
            jax.ShapeDtypeStruct((B, 1, H), jnp.float32),   # new hidden
            jax.ShapeDtypeStruct((B, 1, S), jnp.float32),   # attention weights
        ),
        compiler_params=pltpu.CompilerParams(
            dimension_semantics=("parallel",),               # use both TensorCores on v7x
        ),
    )(emb, hid3, enc_bm, enc_proj, mask3,
      prep["aWh"], prep["av"], prep["Wih"], prep["Whh"],
      prep["b_gi"], prep["b_ghn"], prep["fcW"], prep["fcb"])

    return preds[:, 0, :], h_new[:, 0, :], attn[:, 0, :]


def reference_forward(trg_last, hidden, encoder_outputs, mask, p):
    """Pure-JAX f32 reference mirroring the PyTorch forward (unmerged weights)."""
    emb = p["embedding"][trg_last]
    enc = jnp.transpose(encoder_outputs, (1, 0, 2))
    H = hidden.shape[-1]
    energy = jnp.tanh(jnp.einsum("bsd,dh->bsh", enc, p["aWe"])
                      + (hidden @ p["aWh"])[:, None, :] + p["ab"][None])
    scores = jnp.sum(energy * p["av"][None], axis=-1)
    scores = jnp.where(mask == 0.0, -1e10, scores)
    a = jax.nn.softmax(scores, axis=-1)
    weighted = jnp.einsum("bs,bse->be", a, enc)
    gi = emb @ p["WihE"] + weighted @ p["WihW"] + p["bih"]
    gh = hidden @ p["Whh"] + p["bhh"]
    r = jax.nn.sigmoid(gi[:, :H] + gh[:, :H])
    z = jax.nn.sigmoid(gi[:, H:2 * H] + gh[:, H:2 * H])
    n = jnp.tanh(gi[:, 2 * H:] + r * gh[:, 2 * H:])
    h_new = (1.0 - z) * n + z * hidden
    pred = h_new @ p["fcWh"] + weighted @ p["fcWw"] + emb @ p["fcWe"] + p["fcb"]
    return pred, h_new, a


if __name__ == "__main__":
    # Small, deterministic config.
    B, S = 2, 8                      # batch, src_len
    O, E, ENC, H = 64, 32, 32, 128   # output_dim, emb_dim, enc_hid_dim, dec_hid_dim
    E2 = 2 * ENC

    key = jax.random.PRNGKey(0)
    ks = jax.random.split(key, 20)

    def init(k, shape, scale=0.1):
        return jax.random.normal(k, shape, jnp.float32) * scale

    params = dict(
        embedding=init(ks[0], (O, E)),
        # attention: Linear(E2 + H -> H), split by concat order (hidden ; enc), plus v (H -> 1)
        aWh=init(ks[1], (H, H)), aWe=init(ks[2], (E2, H)), ab=init(ks[3], (1, H)),
        av=init(ks[4], (1, H)),
        # GRU: W_ih (E + E2 -> 3H) split by concat order (emb ; weighted), W_hh (H -> 3H); gates r,z,n
        WihE=init(ks[5], (E, 3 * H)), WihW=init(ks[6], (E2, 3 * H)), bih=init(ks[7], (1, 3 * H)),
        Whh=init(ks[8], (H, 3 * H)), bhh=init(ks[9], (1, 3 * H)),
        # fc: Linear(H + E2 + E -> O), split by concat order (output ; weighted ; embedded)
        fcWh=init(ks[10], (H, O)), fcWw=init(ks[11], (E2, O)), fcWe=init(ks[12], (E, O)),
        fcb=init(ks[13], (1, O)),
    )

    trg_last = jax.random.randint(ks[14], (B,), 0, O, dtype=jnp.int32)
    hidden = init(ks[15], (B, H), 1.0)
    encoder_outputs = init(ks[16], (S, B, E2), 1.0)       # PyTorch layout [src_len, batch, 2*enc_hid]
    mask = jnp.ones((B, S), jnp.float32).at[1, 5:].set(0.0)

    # One-time prep (per model / per source sequence), then the per-step Pallas kernel.
    prep = prepare_decoder_params(params)
    enc_bm, enc_proj = precompute_encoder_context(encoder_outputs, prep)
    preds, h_new, a = decoder_step(trg_last, hidden, enc_bm, enc_proj, mask, prep)
    jax.block_until_ready((preds, h_new, a))

    ref_p, ref_h, ref_a = reference_forward(trg_last, hidden, encoder_outputs, mask, params)
    # Tolerances account for bf16 MXU operands and the approximate softmax reciprocal;
    # all elementwise math remains f32.
    assert jnp.allclose(preds, ref_p, atol=5e-2, rtol=5e-2), float(jnp.max(jnp.abs(preds - ref_p)))
    assert jnp.allclose(h_new, ref_h, atol=5e-2, rtol=5e-2), float(jnp.max(jnp.abs(h_new - ref_h)))
    assert jnp.allclose(a, ref_a, atol=2e-2, rtol=2e-2), float(jnp.max(jnp.abs(a - ref_a)))

    print("KERNEL_OK")
</pallas_src>

<mosaic_0001>
module attributes {stable_mosaic.version = 11 : i64} {
  func.func @decoder_step_kernel(%arg0: i32, %arg1: memref<1x1x32xf32, #tpu.memory_space<vmem>>, %arg2: memref<1x1x128xf32, #tpu.memory_space<vmem>>, %arg3: memref<1x8x64xf32, #tpu.memory_space<vmem>>, %arg4: memref<1x8x128xf32, #tpu.memory_space<vmem>>, %arg5: memref<1x1x8xf32, #tpu.memory_space<vmem>>, %arg6: memref<128x128xbf16, #tpu.memory_space<vmem>>, %arg7: memref<1x128xbf16, #tpu.memory_space<vmem>>, %arg8: memref<96x384xbf16, #tpu.memory_space<vmem>>, %arg9: memref<128x384xbf16, #tpu.memory_space<vmem>>, %arg10: memref<1x384xf32, #tpu.memory_space<vmem>>, %arg11: memref<1x128xf32, #tpu.memory_space<vmem>>, %arg12: memref<224x64xbf16, #tpu.memory_space<vmem>>, %arg13: memref<1x64xf32, #tpu.memory_space<vmem>>, %arg14: memref<1x1x64xf32, #tpu.memory_space<vmem>>, %arg15: memref<1x1x128xf32, #tpu.memory_space<vmem>>, %arg16: memref<1x1x8xf32, #tpu.memory_space<vmem>>) attributes {dimension_semantics = [#tpu.dimension_semantics<parallel>], iteration_bounds = array<i64: 2>, scalar_prefetch = 0 : i64, scratch_operands = 0 : i64, tpu.core_type = #tpu.core_type<tc>, window_params = [{transform_indices = @transform_0, window_bounds = array<i64: 1, 1, 32>}, {transform_indices = @transform_1, window_bounds = array<i64: 1, 1, 128>}, {transform_indices = @transform_2, window_bounds = array<i64: 1, 8, 64>}, {transform_indices = @transform_3, window_bounds = array<i64: 1, 8, 128>}, {transform_indices = @transform_4, window_bounds = array<i64: 1, 1, 8>}, {pipeline_mode = #tpu.pipeline_mode<synchronous>, transform_indices = @transform_5, window_bounds = array<i64: 128, 128>}, {pipeline_mode = #tpu.pipeline_mode<synchronous>, transform_indices = @transform_6, window_bounds = array<i64: 1, 128>}, {pipeline_mode = #tpu.pipeline_mode<synchronous>, transform_indices = @transform_7, window_bounds = array<i64: 96, 384>}, {pipeline_mode = #tpu.pipeline_mode<synchronous>, transform_indices = @transform_8, window_bounds = array<i64: 128, 384>}, {pipeline_mode = #tpu.pipeline_mode<synchronous>, transform_indices = @transform_9, window_bounds = array<i64: 1, 384>}, {pipeline_mode = #tpu.pipeline_mode<synchronous>, transform_indices = @transform_10, window_bounds = array<i64: 1, 128>}, {pipeline_mode = #tpu.pipeline_mode<synchronous>, transform_indices = @transform_11, window_bounds = array<i64: 224, 64>}, {pipeline_mode = #tpu.pipeline_mode<synchronous>, transform_indices = @transform_12, window_bounds = array<i64: 1, 64>}, {transform_indices = @transform_13, window_bounds = array<i64: 1, 1, 64>}, {transform_indices = @transform_14, window_bounds = array<i64: 1, 1, 128>}, {transform_indices = @transform_15, window_bounds = array<i64: 1, 1, 8>}]} {
    %c0 = arith.constant 0 : index
    %c0_0 = arith.constant 0 : index
    %c0_1 = arith.constant 0 : index
    %0 = vector.load %arg1[%c0, %c0_0, %c0_1] : memref<1x1x32xf32, #tpu.memory_space<vmem>>, vector<1x1x32xf32>
    %1 = vector.shape_cast %0 : vector<1x1x32xf32> to vector<1x32xf32>
    %c0_2 = arith.constant 0 : index
    %c0_3 = arith.constant 0 : index
    %c0_4 = arith.constant 0 : index
    %2 = vector.load %arg2[%c0_2, %c0_3, %c0_4] : memref<1x1x128xf32, #tpu.memory_space<vmem>>, vector<1x1x128xf32>
    %3 = vector.shape_cast %2 : vector<1x1x128xf32> to vector<1x128xf32>
    %c0_5 = arith.constant 0 : index
    %c0_6 = arith.constant 0 : index
    %c0_7 = arith.constant 0 : index
    %4 = vector.load %arg3[%c0_5, %c0_6, %c0_7] : memref<1x8x64xf32, #tpu.memory_space<vmem>>, vector<1x8x64xf32>
    %5 = vector.shape_cast %4 : vector<1x8x64xf32> to vector<8x64xf32>
    %c0_8 = arith.constant 0 : index
    %c0_9 = arith.constant 0 : index
    %c0_10 = arith.constant 0 : index
    %6 = vector.load %arg4[%c0_8, %c0_9, %c0_10] : memref<1x8x128xf32, #tpu.memory_space<vmem>>, vector<1x8x128xf32>
    %7 = vector.shape_cast %6 : vector<1x8x128xf32> to vector<8x128xf32>
    %c0_11 = arith.constant 0 : index
    %c0_12 = arith.constant 0 : index
    %c0_13 = arith.constant 0 : index
    %8 = vector.load %arg5[%c0_11, %c0_12, %c0_13] : memref<1x1x8xf32, #tpu.memory_space<vmem>>, vector<1x1x8xf32>
    %9 = vector.shape_cast %8 : vector<1x1x8xf32> to vector<1x8xf32>
    %10 = arith.truncf %3 : vector<1x128xf32> to vector<1x128xbf16>
    %c0_14 = arith.constant 0 : index
    %c0_15 = arith.constant 0 : index
    %11 = vector.load %arg6[%c0_14, %c0_15] : memref<128x128xbf16, #tpu.memory_space<vmem>>, vector<128x128xbf16>
    %cst = arith.constant dense<0.000000e+00> : vector<1x128xf32>
    %12 = tpu.matmul %10, %11, %cst {dimension_numbers = #tpu.dot_dimension_numbers<[1], [0], [0], [1], [0, 0, 1, 1], [], []>} : vector<1x128xbf16>, vector<128x128xbf16>, vector<1x128xf32> -> vector<1x128xf32>
    %13 = vector.broadcast %12 : vector<1x128xf32> to vector<8x128xf32>
    %14 = arith.addf %7, %13 : vector<8x128xf32>
    %15 = math.tanh %14 : vector<8x128xf32>
    %c0_16 = arith.constant 0 : index
    %c0_17 = arith.constant 0 : index
    %16 = vector.load %arg7[%c0_16, %c0_17] : memref<1x128xbf16, #tpu.memory_space<vmem>>, vector<1x128xbf16>
    %17 = arith.truncf %15 : vector<8x128xf32> to vector<8x128xbf16>
    %cst_18 = arith.constant dense<0.000000e+00> : vector<1x8xf32>
    %18 = tpu.matmul %16, %17, %cst_18 {dimension_numbers = #tpu.dot_dimension_numbers<[1], [1], [0], [0], [0, 0, 1, 0], [], []>} : vector<1x128xbf16>, vector<8x128xbf16>, vector<1x8xf32> -> vector<1x8xf32>
    %cst_19 = arith.constant 0.000000e+00 : f32
    %19 = vector.broadcast %cst_19 : f32 to vector<1x8xf32>
    %20 = arith.cmpf oeq, %9, %19 : vector<1x8xf32>
    %cst_20 = arith.constant -1.000000e+10 : f32
    %21 = vector.broadcast %cst_20 : f32 to vector<1x8xf32>
    %22 = arith.select %20, %21, %18 : vector<1x8xi1>, vector<1x8xf32>
    %cst_21 = arith.constant dense<0xFF800000> : vector<1xf32>
    %23 = vector.multi_reduction <maximumf>, %22, %cst_21 [1] : vector<1x8xf32> to vector<1xf32>
    %24 = vector.shape_cast %23 : vector<1xf32> to vector<1x1xf32>
    %25 = vector.broadcast %24 : vector<1x1xf32> to vector<1x8xf32>
    %26 = arith.subf %22, %25 : vector<1x8xf32>
    %27 = math.exp %26 : vector<1x8xf32>
    %cst_22 = arith.constant dense<0.000000e+00> : vector<1xf32>
    %28 = vector.multi_reduction <add>, %27, %cst_22 [1] : vector<1x8xf32> to vector<1xf32>
    %29 = vector.shape_cast %28 : vector<1xf32> to vector<1x1xf32>
    %30 = tpu.reciprocal %29 {approx = true} : vector<1x1xf32> -> vector<1x1xf32>
    %31 = vector.broadcast %30 : vector<1x1xf32> to vector<1x8xf32>
    %32 = arith.mulf %27, %31 : vector<1x8xf32>
    %c0_23 = arith.constant 0 : index
    %c0_24 = arith.constant 0 : index
    %c0_25 = arith.constant 0 : index
    %33 = vector.load %arg16[%c0_23, %c0_24, %c0_25] : memref<1x1x8xf32, #tpu.memory_space<vmem>>, vector<1x1x8xf32>
    %34 = vector.shape_cast %33 : vector<1x1x8xf32> to vector<1x8xf32>
    %35 = vector.shape_cast %32 : vector<1x8xf32> to vector<1x1x8xf32>
    tpu.vector_store %arg16[%c0_23, %c0_24, %c0_25], %35 {strides = array<i32>} : memref<1x1x8xf32, #tpu.memory_space<vmem>>, vector<1x1x8xf32>,
    %cst_26 = arith.constant dense<0.000000e+00> : vector<1x64xf32>
    %36 = tpu.matmul %32, %5, %cst_26 {dimension_numbers = #tpu.dot_dimension_numbers<[1], [0], [0], [1], [0, 0, 1, 1], [], []>} : vector<1x8xf32>, vector<8x64xf32>, vector<1x64xf32> -> vector<1x64xf32>
    %37 = tpu.concatenate %1, %36 in 1 : vector<1x32xf32>, vector<1x64xf32> -> vector<1x96xf32>
    %38 = arith.truncf %37 : vector<1x96xf32> to vector<1x96xbf16>
    %c0_27 = arith.constant 0 : index
    %c0_28 = arith.constant 0 : index
    %39 = vector.load %arg8[%c0_27, %c0_28] : memref<96x384xbf16, #tpu.memory_space<vmem>>, vector<96x384xbf16>
    %cst_29 = arith.constant dense<0.000000e+00> : vector<1x384xf32>
    %40 = tpu.matmul %38, %39, %cst_29 {dimension_numbers = #tpu.dot_dimension_numbers<[1], [0], [0], [1], [0, 0, 1, 1], [], []>} : vector<1x96xbf16>, vector<96x384xbf16>, vector<1x384xf32> -> vector<1x384xf32>
    %c0_30 = arith.constant 0 : index
    %c0_31 = arith.constant 0 : index
    %41 = vector.load %arg10[%c0_30, %c0_31] : memref<1x384xf32, #tpu.memory_space<vmem>>, vector<1x384xf32>
    %42 = arith.addf %40, %41 : vector<1x384xf32>
    %43 = arith.truncf %3 : vector<1x128xf32> to vector<1x128xbf16>
    %c0_32 = arith.constant 0 : index
    %c0_33 = arith.constant 0 : index
    %44 = vector.load %arg9[%c0_32, %c0_33] : memref<128x384xbf16, #tpu.memory_space<vmem>>, vector<128x384xbf16>
    %cst_34 = arith.constant dense<0.000000e+00> : vector<1x384xf32>
    %45 = tpu.matmul %43, %44, %cst_34 {dimension_numbers = #tpu.dot_dimension_numbers<[1], [0], [0], [1], [0, 0, 1, 1], [], []>} : vector<1x128xbf16>, vector<128x384xbf16>, vector<1x384xf32> -> vector<1x384xf32>
    %46 = vector.extract_strided_slice %42 {offsets = [0, 0], sizes = [1, 128], strides = [1, 1]} : vector<1x384xf32> to vector<1x128xf32>
    %47 = vector.extract_strided_slice %45 {offsets = [0, 0], sizes = [1, 128], strides = [1, 1]} : vector<1x384xf32> to vector<1x128xf32>
    %48 = arith.addf %46, %47 : vector<1x128xf32>
    %49 = arith.negf %48 : vector<1x128xf32>
    %50 = math.exp %49 : vector<1x128xf32>
    %cst_35 = arith.constant 1.000000e+00 : f32
    %51 = vector.broadcast %cst_35 : f32 to vector<1x128xf32>
    %52 = arith.addf %51, %50 : vector<1x128xf32>
    %53 = arith.divf %51, %52 : vector<1x128xf32>
    %54 = vector.extract_strided_slice %42 {offsets = [0, 128], sizes = [1, 128], strides = [1, 1]} : vector<1x384xf32> to vector<1x128xf32>
    %55 = vector.extract_strided_slice %45 {offsets = [0, 128], sizes = [1, 128], strides = [1, 1]} : vector<1x384xf32> to vector<1x128xf32>
    %56 = arith.addf %54, %55 : vector<1x128xf32>
    %57 = arith.negf %56 : vector<1x128xf32>
    %58 = math.exp %57 : vector<1x128xf32>
    %cst_36 = arith.constant 1.000000e+00 : f32
    %59 = vector.broadcast %cst_36 : f32 to vector<1x128xf32>
    %60 = arith.addf %59, %58 : vector<1x128xf32>
    %61 = arith.divf %59, %60 : vector<1x128xf32>
    %62 = vector.extract_strided_slice %42 {offsets = [0, 256], sizes = [1, 128], strides = [1, 1]} : vector<1x384xf32> to vector<1x128xf32>
    %63 = vector.extract_strided_slice %45 {offsets = [0, 256], sizes = [1, 128], strides = [1, 1]} : vector<1x384xf32> to vector<1x128xf32>
    %c0_37 = arith.constant 0 : index
    %c0_38 = arith.constant 0 : index
    %64 = vector.load %arg11[%c0_37, %c0_38] : memref<1x128xf32, #tpu.memory_space<vmem>>, vector<1x128xf32>
    %65 = arith.addf %63, %64 : vector<1x128xf32>
    %66 = arith.mulf %53, %65 : vector<1x128xf32>
    %67 = arith.addf %62, %66 : vector<1x128xf32>
    %68 = math.tanh %67 : vector<1x128xf32>
    %cst_39 = arith.constant 1.000000e+00 : f32
    %69 = vector.broadcast %cst_39 : f32 to vector<1x128xf32>
    %70 = arith.subf %69, %61 : vector<1x128xf32>
    %71 = arith.mulf %70, %68 : vector<1x128xf32>
    %72 = arith.mulf %61, %3 : vector<1x128xf32>
    %73 = arith.addf %71, %72 : vector<1x128xf32>
    %c0_40 = arith.constant 0 : index
    %c0_41 = arith.constant 0 : index
    %c0_42 = arith.constant 0 : index
    %74 = vector.load %arg15[%c0_40, %c0_41, %c0_42] : memref<1x1x128xf32, #tpu.memory_space<vmem>>, vector<1x1x128xf32>
    %75 = vector.shape_cast %74 : vector<1x1x128xf32> to vector<1x128xf32>
    %76 = vector.shape_cast %73 : vector<1x128xf32> to vector<1x1x128xf32>
    tpu.vector_store %arg15[%c0_40, %c0_41, %c0_42], %76 {strides = array<i32>} : memref<1x1x128xf32, #tpu.memory_space<vmem>>, vector<1x1x128xf32>,
    %77 = tpu.concatenate %73, %36, %1 in 1 : vector<1x128xf32>, vector<1x64xf32>, vector<1x32xf32> -> vector<1x224xf32>
    %78 = arith.truncf %77 : vector<1x224xf32> to vector<1x224xbf16>
    %c0_43 = arith.constant 0 : index
    %c0_44 = arith.constant 0 : index
    %79 = vector.load %arg12[%c0_43, %c0_44] : memref<224x64xbf16, #tpu.memory_space<vmem>>, vector<224x64xbf16>
    %cst_45 = arith.constant dense<0.000000e+00> : vector<1x64xf32>
    %80 = tpu.matmul %78, %79, %cst_45 {dimension_numbers = #tpu.dot_dimension_numbers<[1], [0], [0], [1], [0, 0, 1, 1], [], []>} : vector<1x224xbf16>, vector<224x64xbf16>, vector<1x64xf32> -> vector<1x64xf32>
    %c0_46 = arith.constant 0 : index
    %c0_47 = arith.constant 0 : index
    %81 = vector.load %arg13[%c0_46, %c0_47] : memref<1x64xf32, #tpu.memory_space<vmem>>, vector<1x64xf32>
    %82 = arith.addf %80, %81 : vector<1x64xf32>
    %c0_48 = arith.constant 0 : index
    %c0_49 = arith.constant 0 : index
    %c0_50 = arith.constant 0 : index
    %83 = vector.load %arg14[%c0_48, %c0_49, %c0_50] : memref<1x1x64xf32, #tpu.memory_space<vmem>>, vector<1x1x64xf32>
    %84 = vector.shape_cast %83 : vector<1x1x64xf32> to vector<1x64xf32>
    %85 = vector.shape_cast %82 : vector<1x64xf32> to vector<1x1x64xf32>
    tpu.vector_store %arg14[%c0_48, %c0_49, %c0_50], %85 {strides = array<i32>} : memref<1x1x64xf32, #tpu.memory_space<vmem>>, vector<1x1x64xf32>,
    return
  }
  func.func @transform_0(%arg0: i32) -> (i32, i32, i32) {
    %c0_i32 = arith.constant 0 : i32
    %c0_i32_0 = arith.constant 0 : i32
    %c0_i32_1 = arith.constant 0 : i32
    return %arg0, %c0_i32, %c0_i32_0 : i32, i32, i32
  }
  func.func @transform_1(%arg0: i32) -> (i32, i32, i32) {
    %c0_i32 = arith.constant 0 : i32
    %c0_i32_0 = arith.constant 0 : i32
    %c0_i32_1 = arith.constant 0 : i32
    return %arg0, %c0_i32, %c0_i32_0 : i32, i32, i32
  }
  func.func @transform_2(%arg0: i32) -> (i32, i32, i32) {
    %c0_i32 = arith.constant 0 : i32
    %c0_i32_0 = arith.constant 0 : i32
    %c0_i32_1 = arith.constant 0 : i32
    return %arg0, %c0_i32, %c0_i32_0 : i32, i32, i32
  }
  func.func @transform_3(%arg0: i32) -> (i32, i32, i32) {
    %c0_i32 = arith.constant 0 : i32
    %c0_i32_0 = arith.constant 0 : i32
    %c0_i32_1 = arith.constant 0 : i32
    return %arg0, %c0_i32, %c0_i32_0 : i32, i32, i32
  }
  func.func @transform_4(%arg0: i32) -> (i32, i32, i32) {
    %c0_i32 = arith.constant 0 : i32
    %c0_i32_0 = arith.constant 0 : i32
    %c0_i32_1 = arith.constant 0 : i32
    return %arg0, %c0_i32, %c0_i32_0 : i32, i32, i32
  }
  func.func @transform_5(%arg0: i32) -> (i32, i32) {
    %c0_i32 = arith.constant 0 : i32
    %c0_i32_0 = arith.constant 0 : i32
    %c0_i32_1 = arith.constant 0 : i32
    return %c0_i32, %c0_i32_0 : i32, i32
  }
  func.func @transform_6(%arg0: i32) -> (i32, i32) {
    %c0_i32 = arith.constant 0 : i32
    %c0_i32_0 = arith.constant 0 : i32
    %c0_i32_1 = arith.constant 0 : i32
    return %c0_i32, %c0_i32_0 : i32, i32
  }
  func.func @transform_7(%arg0: i32) -> (i32, i32) {
    %c0_i32 = arith.constant 0 : i32
    %c0_i32_0 = arith.constant 0 : i32
    %c0_i32_1 = arith.constant 0 : i32
    return %c0_i32, %c0_i32_0 : i32, i32
  }
  func.func @transform_8(%arg0: i32) -> (i32, i32) {
    %c0_i32 = arith.constant 0 : i32
    %c0_i32_0 = arith.constant 0 : i32
    %c0_i32_1 = arith.constant 0 : i32
    return %c0_i32, %c0_i32_0 : i32, i32
  }
  func.func @transform_9(%arg0: i32) -> (i32, i32) {
    %c0_i32 = arith.constant 0 : i32
    %c0_i32_0 = arith.constant 0 : i32
    %c0_i32_1 = arith.constant 0 : i32
    return %c0_i32, %c0_i32_0 : i32, i32
  }
  func.func @transform_10(%arg0: i32) -> (i32, i32) {
    %c0_i32 = arith.constant 0 : i32
    %c0_i32_0 = arith.constant 0 : i32
    %c0_i32_1 = arith.constant 0 : i32
    return %c0_i32, %c0_i32_0 : i32, i32
  }
  func.func @transform_11(%arg0: i32) -> (i32, i32) {
    %c0_i32 = arith.constant 0 : i32
    %c0_i32_0 = arith.constant 0 : i32
    %c0_i32_1 = arith.constant 0 : i32
    return %c0_i32, %c0_i32_0 : i32, i32
  }
  func.func @transform_12(%arg0: i32) -> (i32, i32) {
    %c0_i32 = arith.constant 0 : i32
    %c0_i32_0 = arith.constant 0 : i32
    %c0_i32_1 = arith.constant 0 : i32
    return %c0_i32, %c0_i32_0 : i32, i32
  }
  func.func @transform_13(%arg0: i32) -> (i32, i32, i32) {
    %c0_i32 = arith.constant 0 : i32
    %c0_i32_0 = arith.constant 0 : i32
    %c0_i32_1 = arith.constant 0 : i32
    return %arg0, %c0_i32, %c0_i32_0 : i32, i32, i32
  }
  func.func @transform_14(%arg0: i32) -> (i32, i32, i32) {
    %c0_i32 = arith.constant 0 : i32
    %c0_i32_0 = arith.constant 0 : i32
    %c0_i32_1 = arith.constant 0 : i32
    return %arg0, %c0_i32, %c0_i32_0 : i32, i32, i32
  }
  func.func @transform_15(%arg0: i32) -> (i32, i32, i32) {
    %c0_i32 = arith.constant 0 : i32
    %c0_i32_0 = arith.constant 0 : i32
    %c0_i32_1 = arith.constant 0 : i32
    return %arg0, %c0_i32, %c0_i32_0 : i32, i32, i32
  }
}

</mosaic_0001>

<llo_original>
// kernel: tpu_custom_call.1
$region0: #{tpu_custom_call.1}
  #allocation0 [shape = 'u32[]', space=smem, size = 0x4, offset = 0x4, fixed_abs, tag = 'smem constant byte address 0x4 - core index']
  #allocation1 [shape = 'u32[144,128]{1,0:T(1,128)}', space=vmem, size = 0x12000, scoped, tag = 'internal scratch']
  %s0 = inlined_call_operand.vmem [shape: f32[2,1,32], index: 0, kind: input, shape index: {}]
  %s1 = inlined_call_operand.vmem [shape: f32[2,1,128], index: 1, kind: input, shape index: {}]
  %s2 = inlined_call_operand.vmem [shape: f32[2,8,64], index: 2, kind: input, shape index: {}]
  %s3 = inlined_call_operand.vmem [shape: f32[2,8,128], index: 3, kind: input, shape index: {}]
  %s4 = inlined_call_operand.vmem [shape: f32[2,1,8], index: 4, kind: input, shape index: {}]
  %s5 = inlined_call_operand.hbm [shape: bf16[128,128], index: 5, kind: input, shape index: {}]
  %s6 = inlined_call_operand.vmem [shape: bf16[1,128], index: 6, kind: input, shape index: {}]
  %s7 = inlined_call_operand.vmem [shape: bf16[96,384], index: 7, kind: input, shape index: {}]
  %s8 = inlined_call_operand.hbm [shape: bf16[128,384], index: 8, kind: input, shape index: {}]
  %s9 = inlined_call_operand.vmem [shape: f32[1,384], index: 9, kind: input, shape index: {}]
  %s10 = inlined_call_operand.vmem [shape: f32[1,128], index: 10, kind: input, shape index: {}]
  %s11 = inlined_call_operand.vmem [shape: bf16[224,64], index: 11, kind: input, shape index: {}]
  %s12 = inlined_call_operand.vmem [shape: f32[1,64], index: 12, kind: input, shape index: {}]
  %s13 = inlined_call_operand.hbm [shape: f32[2,1,64], index: 13, kind: output, shape index: {0}]
  %s14 = inlined_call_operand.hbm [shape: f32[2,1,128], index: 14, kind: output, shape index: {1}]
  %s15 = inlined_call_operand.hbm [shape: f32[2,1,8], index: 15, kind: output, shape index: {2}]
  %16 = xla_tuple %s13, %s14, %s15
  %s17 = sld [smem:[#allocation0]]
  $region109: #{tpu_custom_call.1} parent=0
    _
  %s19 = ssub.s32 1, %s17
  %s20 = scalar_select 0, %s19, %s17
  $region1: #{tpu_custom_call.1} parent=0
    #allocation2 [shape = 'u8[32768]{0}', space=vmem, size = 0x8000, scoped, tag = 'input window, operand 5, single buffered']
    #allocation3 [shape = 's32[2]{0}', space=sflag, size = 0x8, scoped, tag = 'scoped memory for tpu_custom_call.1']
    #allocation4 [shape = 's32[2]{0}', space=sflag, size = 0x8, scoped, tag = 'scoped memory for tpu_custom_call.1']
    #allocation5 [shape = 'u8[98304]{0}', space=vmem, size = 0x18000, scoped, tag = 'input window, operand 8, single buffered']
    #allocation6 [shape = 's32[1]{0}', space=sflag, size = 0x4, scoped, tag = 'scoped memory for tpu_custom_call.1']
    #allocation7 [shape = 'u8[1024]{0}', space=vmem, size = 0x400, scoped, tag = 'output window, operand 0']
    #allocation8 [shape = 'u8[1024]{0}', space=vmem, size = 0x400, scoped, tag = 'output window, operand 1']
    #allocation9 [shape = 's32[2]{0}', space=sflag, size = 0x8, scoped, tag = 'scoped memory for tpu_custom_call.1']
    #allocation10 [shape = 'u8[1024]{0}', space=vmem, size = 0x400, scoped, tag = 'output window, operand 2']
    %21 = vsyncpa [#allocation3], 0
    %22 = vsyncpa [#allocation6], 0
    %23 = vsyncpa [#allocation4], 0
    %s24 = scalar_lea.sflag [#allocation4], 1
    %25 = vsyncpa %s24, 0
    %26 = vsyncpa [#allocation9], 0
    %s27 = scalar_lea.sflag [#allocation9], 1
    %28 = vsyncpa %s27, 0
    loop: start=0, step=1, limit=4
    $region2: #{tpu_custom_call.1} parent=1 // loop_pre_header
      _
    $region3: #{tpu_custom_call.1} parent=1 // loop_header
      %s30 = sphi 0, %s34
      %p31 = scmp.ge.s32.totalorder %s30, 4
      %s40 = sphi 0, %s42
      %s43 = sphi 0, %s40
      %s44 = sphi 0, %s43
      %s60 = sphi 0, %s44
      %s66 = sphi 0, %s68
      %s69 = sphi 0, %s66
      %s70 = sphi 0, %s69
      %s86 = sphi 0, %s70
      %s92 = sphi 0, %s94
      %s95 = sphi 0, %s92
      %s96 = sphi 0, %s95
      %s112 = sphi 0, %s96
      %s118 = sphi 0, %s120
      %s121 = sphi 0, %s118
      %s122 = sphi 0, %s121
      %s138 = sphi 0, %s122
      %s144 = sphi 0, %s146
      %s147 = sphi 0, %s144
      %s148 = sphi 0, %s147
      %s164 = sphi 0, %s148
      %s168 = sphi 0, %s168
      %s170 = sphi 0, %s168
      %s171 = sphi 0, %s170
      %s185 = sphi 0, %s171
      %s189 = sphi 0, %s189
      %s191 = sphi 0, %s189
      %s192 = sphi 0, %s191
      %s206 = sphi 0, %s192
      %s210 = sphi 0, %s210
      %s212 = sphi 0, %s210
      %s213 = sphi 0, %s212
      %s227 = sphi 0, %s213
      %s231 = sphi 0, %s231
      %s233 = sphi 0, %s231
      %s234 = sphi 0, %s233
      %s248 = sphi 0, %s234
      %s252 = sphi 0, %s252
      %s254 = sphi 0, %s252
      %s255 = sphi 0, %s254
      %s269 = sphi 0, %s255
      %s273 = sphi 0, %s273
      %s275 = sphi 0, %s273
      %s276 = sphi 0, %s275
      %s290 = sphi 0, %s276
      %s294 = sphi 0, %s294
      %s296 = sphi 0, %s294
      %s297 = sphi 0, %s296
      %s311 = sphi 0, %s297
      %s315 = sphi 0, %s315
      %s317 = sphi 0, %s315
      %s318 = sphi 0, %s317
      %s332 = sphi 0, %s318
      %s338 = sphi 0, %s340
      %s341 = sphi 0, %s338
      %s342 = sphi 0, %s341
      %s358 = sphi 0, %s342
      %s364 = sphi 0, %s366
      %s367 = sphi 0, %s364
      %s368 = sphi 0, %s367
      %s384 = sphi 0, %s368
      %s390 = sphi 0, %s392
      %s393 = sphi 0, %s390
      %s394 = sphi 0, %s393
      %s410 = sphi 0, %s394
    $region4: #{tpu_custom_call.1} parent=1 // loop_header_branch
      %33 = sbr.rel (%p31) target = $region8
    $region5: #{tpu_custom_call.1} parent=1 // loop_body
      %s35 = ssub.s32 %s30, 1
      %s36 = ssub.s32 %s30, 2
      %s37 = sadd.s32 %s30, 1
      %s38 = ssub.s32 %s30, %s37
      %p39 = scmp.eq.s32.totalorder %s38, 0
      %s41 = sadd.s32 %s40, 1
      %s42 = scalar_select %p39, %s40, %s41
      %p45 = pneg %p39
      %p46 = scmp.eq.s32.totalorder %s30, 1
      %p47 = por %p45, %p46
      %p48 = scmp.ne.s32.totalorder %s40, %s43
      %p49 = scmp.eq.s32.totalorder %s30, 0
      %p50 = por %p48, %p49
      %p51 = scmp.ne.s32.totalorder %s40, %s43
      %p52 = scmp.eq.s32.totalorder %s35, 1
      %p53 = por %p51, %p52
      %p54 = scmp.ne.s32.totalorder %s43, %s44
      %p55 = scmp.eq.s32.totalorder %s35, 0
      %p56 = por %p54, %p55
      %p57 = scmp.ne.s32.totalorder %s43, %s44
      %p58 = scmp.eq.s32.totalorder %s36, 1
      %p59 = por %p57, %p58
      %p61 = scmp.ne.s32.totalorder %s44, %s60
      %p62 = scmp.eq.s32.totalorder %s36, 0
      %p63 = por %p61, %p62
      %s64 = ssub.s32 %s30, %s37
      %p65 = scmp.eq.s32.totalorder %s64, 0
      %s67 = sadd.s32 %s66, 1
      %s68 = scalar_select %p65, %s66, %s67
      %p71 = pneg %p65
      %p72 = scmp.eq.s32.totalorder %s30, 1
      %p73 = por %p71, %p72
      %p74 = scmp.ne.s32.totalorder %s66, %s69
      %p75 = scmp.eq.s32.totalorder %s30, 0
      %p76 = por %p74, %p75
      %p77 = scmp.ne.s32.totalorder %s66, %s69
      %p78 = scmp.eq.s32.totalorder %s35, 1
      %p79 = por %p77, %p78
      %p80 = scmp.ne.s32.totalorder %s69, %s70
      %p81 = scmp.eq.s32.totalorder %s35, 0
      %p82 = por %p80, %p81
      %p83 = scmp.ne.s32.totalorder %s69, %s70
      %p84 = scmp.eq.s32.totalorder %s36, 1
      %p85 = por %p83, %p84
      %p87 = scmp.ne.s32.totalorder %s70, %s86
      %p88 = scmp.eq.s32.totalorder %s36, 0
      %p89 = por %p87, %p88
      %s90 = ssub.s32 %s30, %s37
      %p91 = scmp.eq.s32.totalorder %s90, 0
      %s93 = sadd.s32 %s92, 1
      %s94 = scalar_select %p91, %s92, %s93
      %p97 = pneg %p91
      %p98 = scmp.eq.s32.totalorder %s30, 1
      %p99 = por %p97, %p98
      %p100 = scmp.ne.s32.totalorder %s92, %s95
      %p101 = scmp.eq.s32.totalorder %s30, 0
      %p102 = por %p100, %p101
      %p103 = scmp.ne.s32.totalorder %s92, %s95
      %p104 = scmp.eq.s32.totalorder %s35, 1
      %p105 = por %p103, %p104
      %p106 = scmp.ne.s32.totalorder %s95, %s96
      %p107 = scmp.eq.s32.totalorder %s35, 0
      %p108 = por %p106, %p107
      %p109 = scmp.ne.s32.totalorder %s95, %s96
      %p110 = scmp.eq.s32.totalorder %s36, 1
      %p111 = por %p109, %p110
      %p113 = scmp.ne.s32.totalorder %s96, %s112
      %p114 = scmp.eq.s32.totalorder %s36, 0
      %p115 = por %p113, %p114
      %s116 = ssub.s32 %s30, %s37
      %p117 = scmp.eq.s32.totalorder %s116, 0
      %s119 = sadd.s32 %s118, 1
      %s120 = scalar_select %p117, %s118, %s119
      %p123 = pneg %p117
      %p124 = scmp.eq.s32.totalorder %s30, 1
      %p125 = por %p123, %p124
      %p126 = scmp.ne.s32.totalorder %s118, %s121
      %p127 = scmp.eq.s32.totalorder %s30, 0
      %p128 = por %p126, %p127
      %p129 = scmp.ne.s32.totalorder %s118, %s121
      %p130 = scmp.eq.s32.totalorder %s35, 1
      %p131 = por %p129, %p130
      %p132 = scmp.ne.s32.totalorder %s121, %s122
      %p133 = scmp.eq.s32.totalorder %s35, 0
      %p134 = por %p132, %p133
      %p135 = scmp.ne.s32.totalorder %s121, %s122
      %p136 = scmp.eq.s32.totalorder %s36, 1
      %p137 = por %p135, %p136
      %p139 = scmp.ne.s32.totalorder %s122, %s138
      %p140 = scmp.eq.s32.totalorder %s36, 0
      %p141 = por %p139, %p140
      %s142 = ssub.s32 %s30, %s37
      %p143 = scmp.eq.s32.totalorder %s142, 0
      %s145 = sadd.s32 %s144, 1
      %s146 = scalar_select %p143, %s144, %s145
      %p149 = pneg %p143
      %p150 = scmp.eq.s32.totalorder %s30, 1
      %p151 = por %p149, %p150
      %p152 = scmp.ne.s32.totalorder %s144, %s147
      %p153 = scmp.eq.s32.totalorder %s30, 0
      %p154 = por %p152, %p153
      %p155 = scmp.ne.s32.totalorder %s144, %s147
      %p156 = scmp.eq.s32.totalorder %s35, 1
      %p157 = por %p155, %p156
      %p158 = scmp.ne.s32.totalorder %s147, %s148
      %p159 = scmp.eq.s32.totalorder %s35, 0
      %p160 = por %p158, %p159
      %p161 = scmp.ne.s32.totalorder %s147, %s148
      %p162 = scmp.eq.s32.totalorder %s36, 1
      %p163 = por %p161, %p162
      %p165 = scmp.ne.s32.totalorder %s148, %s164
      %p166 = scmp.eq.s32.totalorder %s36, 0
      %p167 = por %p165, %p166
      %s169 = sadd.s32 %s168, 1
      %p172 = scmp.eq.s32.totalorder %s30, 1
      %p173 = scmp.ne.s32.totalorder %s168, %s170
      %p174 = scmp.eq.s32.totalorder %s30, 0
      %p175 = por %p173, %p174
      %p176 = scmp.ne.s32.totalorder %s168, %s170
      %p177 = scmp.eq.s32.totalorder %s35, 1
      %p178 = por %p176, %p177
      %p179 = scmp.ne.s32.totalorder %s170, %s171
      %p180 = scmp.eq.s32.totalorder %s35, 0
      %p181 = por %p179, %p180
      %p182 = scmp.ne.s32.totalorder %s170, %s171
      %p183 = scmp.eq.s32.totalorder %s36, 1
      %p184 = por %p182, %p183
      %p186 = scmp.ne.s32.totalorder %s171, %s185
      %p187 = scmp.eq.s32.totalorder %s36, 0
      %p188 = por %p186, %p187
      %s190 = sadd.s32 %s189, 1
      %p193 = scmp.eq.s32.totalorder %s30, 1
      %p194 = scmp.ne.s32.totalorder %s189, %s191
      %p195 = scmp.eq.s32.totalorder %s30, 0
      %p196 = por %p194, %p195
      %p197 = scmp.ne.s32.totalorder %s189, %s191
      %p198 = scmp.eq.s32.totalorder %s35, 1
      %p199 = por %p197, %p198
      %p200 = scmp.ne.s32.totalorder %s191, %s192
      %p201 = scmp.eq.s32.totalorder %s35, 0
      %p202 = por %p200, %p201
      %p203 = scmp.ne.s32.totalorder %s191, %s192
      %p204 = scmp.eq.s32.totalorder %s36, 1
      %p205 = por %p203, %p204
      %p207 = scmp.ne.s32.totalorder %s192, %s206
      %p208 = scmp.eq.s32.totalorder %s36, 0
      %p209 = por %p207, %p208
      %s211 = sadd.s32 %s210, 1
      %p214 = scmp.eq.s32.totalorder %s30, 1
      %p215 = scmp.ne.s32.totalorder %s210, %s212
      %p216 = scmp.eq.s32.totalorder %s30, 0
      %p217 = por %p215, %p216
      %p218 = scmp.ne.s32.totalorder %s210, %s212
      %p219 = scmp.eq.s32.totalorder %s35, 1
      %p220 = por %p218, %p219
      %p221 = scmp.ne.s32.totalorder %s212, %s213
      %p222 = scmp.eq.s32.totalorder %s35, 0
      %p223 = por %p221, %p222
      %p224 = scmp.ne.s32.totalorder %s212, %s213
      %p225 = scmp.eq.s32.totalorder %s36, 1
      %p226 = por %p224, %p225
      %p228 = scmp.ne.s32.totalorder %s213, %s227
      %p229 = scmp.eq.s32.totalorder %s36, 0
      %p230 = por %p228, %p229
      %s232 = sadd.s32 %s231, 1
      %p235 = scmp.eq.s32.totalorder %s30, 1
      %p236 = scmp.ne.s32.totalorder %s231, %s233
      %p237 = scmp.eq.s32.totalorder %s30, 0
      %p238 = por %p236, %p237
      %p239 = scmp.ne.s32.totalorder %s231, %s233
      %p240 = scmp.eq.s32.totalorder %s35, 1
      %p241 = por %p239, %p240
      %p242 = scmp.ne.s32.totalorder %s233, %s234
      %p243 = scmp.eq.s32.totalorder %s35, 0
      %p244 = por %p242, %p243
      %p245 = scmp.ne.s32.totalorder %s233, %s234
      %p246 = scmp.eq.s32.totalorder %s36, 1
      %p247 = por %p245, %p246
      %p249 = scmp.ne.s32.totalorder %s234, %s248
      %p250 = scmp.eq.s32.totalorder %s36, 0
      %p251 = por %p249, %p250
      %s253 = sadd.s32 %s252, 1
      %p256 = scmp.eq.s32.totalorder %s30, 1
      %p257 = scmp.ne.s32.totalorder %s252, %s254
      %p258 = scmp.eq.s32.totalorder %s30, 0
      %p259 = por %p257, %p258
      %p260 = scmp.ne.s32.totalorder %s252, %s254
      %p261 = scmp.eq.s32.totalorder %s35, 1
      %p262 = por %p260, %p261
      %p263 = scmp.ne.s32.totalorder %s254, %s255
      %p264 = scmp.eq.s32.totalorder %s35, 0
      %p265 = por %p263, %p264
      %p266 = scmp.ne.s32.totalorder %s254, %s255
      %p267 = scmp.eq.s32.totalorder %s36, 1
      %p268 = por %p266, %p267
      %p270 = scmp.ne.s32.totalorder %s255, %s269
      %p271 = scmp.eq.s32.totalorder %s36, 0
      %p272 = por %p270, %p271
      %s274 = sadd.s32 %s273, 1
      %p277 = scmp.eq.s32.totalorder %s30, 1
      %p278 = scmp.ne.s32.totalorder %s273, %s275
      %p279 = scmp.eq.s32.totalorder %s30, 0
      %p280 = por %p278, %p279
      %p281 = scmp.ne.s32.totalorder %s273, %s275
      %p282 = scmp.eq.s32.totalorder %s35, 1
      %p283 = por %p281, %p282
      %p284 = scmp.ne.s32.totalorder %s275, %s276
      %p285 = scmp.eq.s32.totalorder %s35, 0
      %p286 = por %p284, %p285
      %p287 = scmp.ne.s32.totalorder %s275, %s276
      %p288 = scmp.eq.s32.totalorder %s36, 1
      %p289 = por %p287, %p288
      %p291 = scmp.ne.s32.totalorder %s276, %s290
      %p292 = scmp.eq.s32.totalorder %s36, 0
      %p293 = por %p291, %p292
      %s295 = sadd.s32 %s294, 1
      %p298 = scmp.eq.s32.totalorder %s30, 1
      %p299 = scmp.ne.s32.totalorder %s294, %s296
      %p300 = scmp.eq.s32.totalorder %s30, 0
      %p301 = por %p299, %p300
      %p302 = scmp.ne.s32.totalorder %s294, %s296
      %p303 = scmp.eq.s32.totalorder %s35, 1
      %p304 = por %p302, %p303
      %p305 = scmp.ne.s32.totalorder %s296, %s297
      %p306 = scmp.eq.s32.totalorder %s35, 0
      %p307 = por %p305, %p306
      %p308 = scmp.ne.s32.totalorder %s296, %s297
      %p309 = scmp.eq.s32.totalorder %s36, 1
      %p310 = por %p308, %p309
      %p312 = scmp.ne.s32.totalorder %s297, %s311
      %p313 = scmp.eq.s32.totalorder %s36, 0
      %p314 = por %p312, %p313
      %s316 = sadd.s32 %s315, 1
      %p319 = scmp.eq.s32.totalorder %s30, 1
      %p320 = scmp.ne.s32.totalorder %s315, %s317
      %p321 = scmp.eq.s32.totalorder %s30, 0
      %p322 = por %p320, %p321
      %p323 = scmp.ne.s32.totalorder %s315, %s317
      %p324 = scmp.eq.s32.totalorder %s35, 1
      %p325 = por %p323, %p324
      %p326 = scmp.ne.s32.totalorder %s317, %s318
      %p327 = scmp.eq.s32.totalorder %s35, 0
      %p328 = por %p326, %p327
      %p329 = scmp.ne.s32.totalorder %s317, %s318
      %p330 = scmp.eq.s32.totalorder %s36, 1
      %p331 = por %p329, %p330
      %p333 = scmp.ne.s32.totalorder %s318, %s332
      %p334 = scmp.eq.s32.totalorder %s36, 0
      %p335 = por %p333, %p334
      %s336 = ssub.s32 %s30, %s37
      %p337 = scmp.eq.s32.totalorder %s336, 0
      %s339 = sadd.s32 %s338, 1
      %s340 = scalar_select %p337, %s338, %s339
      %p343 = pneg %p337
      %p344 = scmp.eq.s32.totalorder %s30, 1
      %p345 = por %p343, %p344
      %p346 = scmp.ne.s32.totalorder %s338, %s341
      %p347 = scmp.eq.s32.totalorder %s30, 0
      %p348 = por %p346, %p347
      %p349 = scmp.ne.s32.totalorder %s338, %s341
      %p350 = scmp.eq.s32.totalorder %s35, 1
      %p351 = por %p349, %p350
      %p352 = scmp.ne.s32.totalorder %s341, %s342
      %p353 = scmp.eq.s32.totalorder %s35, 0
      %p354 = por %p352, %p353
      %p355 = scmp.ne.s32.totalorder %s341, %s342
      %p356 = scmp.eq.s32.totalorder %s36, 1
      %p357 = por %p355, %p356
      %p359 = scmp.ne.s32.totalorder %s342, %s358
      %p360 = scmp.eq.s32.totalorder %s36, 0
      %p361 = por %p359, %p360
      %s362 = ssub.s32 %s30, %s37
      %p363 = scmp.eq.s32.totalorder %s362, 0
      %s365 = sadd.s32 %s364, 1
      %s366 = scalar_select %p363, %s364, %s365
      %p369 = pneg %p363
      %p370 = scmp.eq.s32.totalorder %s30, 1
      %p371 = por %p369, %p370
      %p372 = scmp.ne.s32.totalorder %s364, %s367
      %p373 = scmp.eq.s32.totalorder %s30, 0
      %p374 = por %p372, %p373
      %p375 = scmp.ne.s32.totalorder %s364, %s367
      %p376 = scmp.eq.s32.totalorder %s35, 1
      %p377 = por %p375, %p376
      %p378 = scmp.ne.s32.totalorder %s367, %s368
      %p379 = scmp.eq.s32.totalorder %s35, 0
      %p380 = por %p378, %p379
      %p381 = scmp.ne.s32.totalorder %s367, %s368
      %p382 = scmp.eq.s32.totalorder %s36, 1
      %p383 = por %p381, %p382
      %p385 = scmp.ne.s32.totalorder %s368, %s384
      %p386 = scmp.eq.s32.totalorder %s36, 0
      %p387 = por %p385, %p386
      %s388 = ssub.s32 %s30, %s37
      %p389 = scmp.eq.s32.totalorder %s388, 0
      %s391 = sadd.s32 %s390, 1
      %s392 = scalar_select %p389, %s390, %s391
      %p395 = pneg %p389
      %p396 = scmp.eq.s32.totalorder %s30, 1
      %p397 = por %p395, %p396
      %p398 = scmp.ne.s32.totalorder %s390, %s393
      %p399 = scmp.eq.s32.totalorder %s30, 0
      %p400 = por %p398, %p399
      %p401 = scmp.ne.s32.totalorder %s390, %s393
      %p402 = scmp.eq.s32.totalorder %s35, 1
      %p403 = por %p401, %p402
      %p404 = scmp.ne.s32.totalorder %s393, %s394
      %p405 = scmp.eq.s32.totalorder %s35, 0
      %p406 = por %p404, %p405
      %p407 = scmp.ne.s32.totalorder %s393, %s394
      %p408 = scmp.eq.s32.totalorder %s36, 1
      %p409 = por %p407, %p408
      %p411 = scmp.ne.s32.totalorder %s394, %s410
      %p412 = scmp.eq.s32.totalorder %s36, 0
      %p413 = por %p411, %p412
      %p414 = scmp.le.s32.totalorder 1, %s30
      %p415 = scmp.lt.s32.totalorder %s30, 3
      %p416 = pnand %p414, %p415
      %p417 = pneg %p416
      // Predicated region
      $region9: #{tpu_custom_call.1} parent=5 // pred_check
        _
      $region10: #{tpu_custom_call.1} parent=5 // pred_check_branch
        %419 = sbr.rel (%p416) target = $region12
      $region11: #{tpu_custom_call.1} parent=5 // pred_region
        %s420 = ssub.s32 %s30, 1
        // Predicated region
        $region13: #{tpu_custom_call.1} parent=11 // pred_check
          %p421 = pneg %p181
        $region14: #{tpu_custom_call.1} parent=11 // pred_check_branch
          %423 = sbr.rel (%p421) target = $region16
        $region15: #{tpu_custom_call.1} parent=11 // pred_region
          %s425 = ssub.s32 1024, 1024
          %426 = vsyncadd [#allocation3], %s425
          %s427 = sshll.u32 [#allocation2], 4
          %s428 = int_to_ptr.vmem [resolvable:$true] %s427
          %433 = dma.hbm_to_vmem [thread:$0]  %s5, 1024, %s428, [#allocation3], 64, 64, 4
        $region16: #{tpu_custom_call.1} parent=11 // pred_fallthru
          _
        // Predicated region
        $region17: #{tpu_custom_call.1} parent=11 // pred_check
          %p434 = pneg %p202
        $region18: #{tpu_custom_call.1} parent=11 // pred_check_branch
          %436 = sbr.rel (%p434) target = $region20
        $region19: #{tpu_custom_call.1} parent=11 // pred_region
          _
        $region20: #{tpu_custom_call.1} parent=11 // pred_fallthru
          _
        // Predicated region
        $region21: #{tpu_custom_call.1} parent=11 // pred_check
          %p437 = pneg %p223
        $region22: #{tpu_custom_call.1} parent=11 // pred_check_branch
          %439 = sbr.rel (%p437) target = $region24
        $region23: #{tpu_custom_call.1} parent=11 // pred_region
          _
        $region24: #{tpu_custom_call.1} parent=11 // pred_fallthru
          _
        // Predicated region
        $region25: #{tpu_custom_call.1} parent=11 // pred_check
          %p440 = pneg %p244
        $region26: #{tpu_custom_call.1} parent=11 // pred_check_branch
          %442 = sbr.rel (%p440) target = $region28
        $region27: #{tpu_custom_call.1} parent=11 // pred_region
          %s444 = ssub.s32 3072, 3072
          %445 = vsyncadd [#allocation6], %s444
          %s446 = sshll.u32 [#allocation5], 4
          %s447 = int_to_ptr.vmem [resolvable:$true] %s446
          %452 = dma.hbm_to_vmem [thread:$0]  %s8, 3072, %s447, [#allocation6], 192, 192, 12
        $region28: #{tpu_custom_call.1} parent=11 // pred_fallthru
          _
        // Predicated region
        $region29: #{tpu_custom_call.1} parent=11 // pred_check
          %p453 = pneg %p265
        $region30: #{tpu_custom_call.1} parent=11 // pred_check_branch
          %455 = sbr.rel (%p453) target = $region32
        $region31: #{tpu_custom_call.1} parent=11 // pred_region
          _
        $region32: #{tpu_custom_call.1} parent=11 // pred_fallthru
          _
        // Predicated region
        $region33: #{tpu_custom_call.1} parent=11 // pred_check
          %p456 = pneg %p286
        $region34: #{tpu_custom_call.1} parent=11 // pred_check_branch
          %458 = sbr.rel (%p456) target = $region36
        $region35: #{tpu_custom_call.1} parent=11 // pred_region
          _
        $region36: #{tpu_custom_call.1} parent=11 // pred_fallthru
          _
        // Predicated region
        $region37: #{tpu_custom_call.1} parent=11 // pred_check
          %p459 = pneg %p307
        $region38: #{tpu_custom_call.1} parent=11 // pred_check_branch
          %461 = sbr.rel (%p459) target = $region40
        $region39: #{tpu_custom_call.1} parent=11 // pred_region
          _
        $region40: #{tpu_custom_call.1} parent=11 // pred_fallthru
          _
        // Predicated region
        $region41: #{tpu_custom_call.1} parent=11 // pred_check
          %p462 = pneg %p328
        $region42: #{tpu_custom_call.1} parent=11 // pred_check_branch
          %464 = sbr.rel (%p462) target = $region44
        $region43: #{tpu_custom_call.1} parent=11 // pred_region
          _
        $region44: #{tpu_custom_call.1} parent=11 // pred_fallthru
          _
      $region12: #{tpu_custom_call.1} parent=5 // pred_fallthru
        _
      %p465 = scmp.lt.s32.totalorder %s30, 2
      // Predicated region
      $region45: #{tpu_custom_call.1} parent=5 // pred_check
        %p466 = pneg %p465
      $region46: #{tpu_custom_call.1} parent=5 // pred_check_branch
        %468 = sbr.rel (%p466) target = $region48
      $region47: #{tpu_custom_call.1} parent=5 // pred_region
        // Predicated region
        $region49: #{tpu_custom_call.1} parent=47 // pred_check
          %p469 = pneg %p50
        $region50: #{tpu_custom_call.1} parent=47 // pred_check_branch
          %471 = sbr.rel (%p469) target = $region52
        $region51: #{tpu_custom_call.1} parent=47 // pred_region
          %p472 = scmp.lt.s32.totalorder %s30, 1
          %s473 = scalar_select %p472, %s30, 1
          %s474 = scalar_lea.vmem %s0, %s473
        $region52: #{tpu_custom_call.1} parent=47 // pred_fallthru
          _
        // Predicated region
        $region53: #{tpu_custom_call.1} parent=47 // pred_check
          %p475 = pneg %p76
        $region54: #{tpu_custom_call.1} parent=47 // pred_check_branch
          %477 = sbr.rel (%p475) target = $region56
        $region55: #{tpu_custom_call.1} parent=47 // pred_region
          %p478 = scmp.lt.s32.totalorder %s30, 1
          %s479 = scalar_select %p478, %s30, 1
          %s480 = scalar_lea.vmem %s1, %s479
        $region56: #{tpu_custom_call.1} parent=47 // pred_fallthru
          _
        // Predicated region
        $region57: #{tpu_custom_call.1} parent=47 // pred_check
          %p481 = pneg %p102
        $region58: #{tpu_custom_call.1} parent=47 // pred_check_branch
          %483 = sbr.rel (%p481) target = $region60
        $region59: #{tpu_custom_call.1} parent=47 // pred_region
          %p484 = scmp.lt.s32.totalorder %s30, 1
          %s485 = scalar_select %p484, %s30, 1
          %s486 = smul.addr %s485, 8
          %s487 = scalar_lea.vmem %s2, %s486
        $region60: #{tpu_custom_call.1} parent=47 // pred_fallthru
          _
        // Predicated region
        $region61: #{tpu_custom_call.1} parent=47 // pred_check
          %p488 = pneg %p128
        $region62: #{tpu_custom_call.1} parent=47 // pred_check_branch
          %490 = sbr.rel (%p488) target = $region64
        $region63: #{tpu_custom_call.1} parent=47 // pred_region
          %p491 = scmp.lt.s32.totalorder %s30, 1
          %s492 = scalar_select %p491, %s30, 1
          %s493 = smul.addr %s492, 8
          %s494 = scalar_lea.vmem %s3, %s493
        $region64: #{tpu_custom_call.1} parent=47 // pred_fallthru
          _
        // Predicated region
        $region65: #{tpu_custom_call.1} parent=47 // pred_check
          %p495 = pneg %p154
        $region66: #{tpu_custom_call.1} parent=47 // pred_check_branch
          %497 = sbr.rel (%p495) target = $region68
        $region67: #{tpu_custom_call.1} parent=47 // pred_region
          %p498 = scmp.lt.s32.totalorder %s30, 1
          %s499 = scalar_select %p498, %s30, 1
          %s500 = scalar_lea.vmem %s4, %s499
        $region68: #{tpu_custom_call.1} parent=47 // pred_fallthru
          _
      $region48: #{tpu_custom_call.1} parent=5 // pred_fallthru
        _
      %p501 = scmp.le.s32.totalorder 1, %s30
      %p502 = scmp.lt.s32.totalorder %s30, 3
      %p503 = pnand %p501, %p502
      %p504 = pneg %p503
      // Predicated region
      $region69: #{tpu_custom_call.1} parent=5 // pred_check
        _
      $region70: #{tpu_custom_call.1} parent=5 // pred_check_branch
        %506 = sbr.rel (%p503) target = $region72
      $region71: #{tpu_custom_call.1} parent=5 // pred_region
        %s507 = ssub.s32 %s30, 1
        // Predicated region
        $region73: #{tpu_custom_call.1} parent=71 // pred_check
          %p508 = pneg %p181
        $region74: #{tpu_custom_call.1} parent=71 // pred_check_branch
          %510 = sbr.rel (%p508) target = $region76
        $region75: #{tpu_custom_call.1} parent=71 // pred_region
          %511 = dma.done [#allocation3], 1024
        $region76: #{tpu_custom_call.1} parent=71 // pred_fallthru
          _
        // Predicated region
        $region77: #{tpu_custom_call.1} parent=71 // pred_check
          %p512 = pneg %p244
        $region78: #{tpu_custom_call.1} parent=71 // pred_check_branch
          %514 = sbr.rel (%p512) target = $region80
        $region79: #{tpu_custom_call.1} parent=71 // pred_region
          %515 = dma.done [#allocation6], 3072
        $region80: #{tpu_custom_call.1} parent=71 // pred_fallthru
          _
        %p516 = scmp.lt.s32.totalorder %s35, 1
        %s517 = scalar_select %p516, %s35, 1
        %s518 = scalar_lea.vmem %s0, %s517
        %p519 = pneg %p56
        %p520 = pneg %p53
        %p521 = scmp.lt.s32.totalorder %s35, 1
        %s522 = scalar_select %p521, %s35, 1
        %s523 = scalar_lea.vmem %s1, %s522
        %p524 = pneg %p82
        %p525 = pneg %p79
        %p526 = scmp.lt.s32.totalorder %s35, 1
        %s527 = scalar_select %p526, %s35, 1
        %s528 = smul.addr %s527, 8
        %s529 = scalar_lea.vmem %s2, %s528
        %p530 = pneg %p108
        %p531 = pneg %p105
        %p532 = scmp.lt.s32.totalorder %s35, 1
        %s533 = scalar_select %p532, %s35, 1
        %s534 = smul.addr %s533, 8
        %s535 = scalar_lea.vmem %s3, %s534
        %p536 = pneg %p134
        %p537 = pneg %p131
        %p538 = scmp.lt.s32.totalorder %s35, 1
        %s539 = scalar_select %p538, %s35, 1
        %s540 = scalar_lea.vmem %s4, %s539
        %p541 = pneg %p160
        %p542 = pneg %p157
        %p543 = pneg %p181
        %p544 = pneg %p178
        %p545 = pneg %p202
        %p546 = pneg %p199
        %p547 = pneg %p223
        %p548 = pneg %p220
        %p549 = pneg %p244
        %p550 = pneg %p241
        %p551 = pneg %p265
        %p552 = pneg %p262
        %p553 = pneg %p286
        %p554 = pneg %p283
        %p555 = pneg %p307
        %p556 = pneg %p304
        %p557 = pneg %p328
        %p558 = pneg %p325
        %p559 = pneg %p354
        %p560 = pneg %p351
        %s561 = sand.u32 %s341, 1
        %s562 = scalar_lea.sflag [#allocation4], %s561
        %s563 = sand.u32 %s341, 1
        %s564 = scalar_lea.vmem [#allocation7], %s563
        %p565 = pneg %p380
        %p566 = pneg %p377
        %s567 = sand.u32 %s35, 1
        %s568 = scalar_lea.sflag [#allocation9], %s567
        %s569 = sand.u32 %s367, 1
        %s570 = scalar_lea.vmem [#allocation8], %s569
        %p571 = pneg %p406
        %p572 = pneg %p403
        %s573 = sand.u32 %s35, 1
        %s574 = scalar_lea.sflag [#allocation9], %s573
        %s575 = sand.u32 %s393, 1
        %s576 = scalar_lea.vmem [#allocation10], %s575
        %p577 = scmp.lt.s32.totalorder %s35, 1
        %s578 = scalar_select %p577, %s35, 1
        %s579 = scalar_lea.vmem %s0, %s578
        %p580 = scmp.lt.s32.totalorder %s35, 1
        %s581 = scalar_select %p580, %s35, 1
        %s582 = scalar_lea.vmem %s1, %s581
        %p583 = scmp.lt.s32.totalorder %s35, 1
        %s584 = scalar_select %p583, %s35, 1
        %s585 = smul.addr %s584, 8
        %s586 = scalar_lea.vmem %s2, %s585
        %p587 = scmp.lt.s32.totalorder %s35, 1
        %s588 = scalar_select %p587, %s35, 1
        %s589 = smul.addr %s588, 8
        %s590 = scalar_lea.vmem %s3, %s589
        %p591 = scmp.lt.s32.totalorder %s35, 1
        %s592 = scalar_select %p591, %s35, 1
        %s593 = scalar_lea.vmem %s4, %s592
        %v595 = vld [vmem:[%s579] sm:$0x1]
        %v596 = vld [vmem:[%s582] sm:$0x1]
        %v597 = vld [vmem:[%s586] sm:$0xff]
        %v598 = vld [vmem:[%s590] sm:$0xff]
        %v599 = vld [vmem:[%s593] sm:$0x1]
        %v600 = vpack.c.bf16 %v596, %v596
        %v601 = vld [vmem:[#allocation2] sm:$0xf]
        %v602 = vld [vmem:[#allocation2 + $0x4] sm:$0xf]
        %v603 = vld [vmem:[#allocation2 + $0x8] sm:$0xf]
        %v604 = vld [vmem:[#allocation2 + $0xc] sm:$0xf]
        %v605 = vld [vmem:[#allocation2 + $0x10] sm:$0xf]
        %v606 = vld [vmem:[#allocation2 + $0x14] sm:$0xf]
        %v607 = vld [vmem:[#allocation2 + $0x18] sm:$0xf]
        %v608 = vld [vmem:[#allocation2 + $0x1c] sm:$0xf]
        %v609 = vld [vmem:[#allocation2 + $0x20] sm:$0xf]
        %v610 = vld [vmem:[#allocation2 + $0x24] sm:$0xf]
        %v611 = vld [vmem:[#allocation2 + $0x28] sm:$0xf]
        %v612 = vld [vmem:[#allocation2 + $0x2c] sm:$0xf]
        %v613 = vld [vmem:[#allocation2 + $0x30] sm:$0xf]
        %v614 = vld [vmem:[#allocation2 + $0x34] sm:$0xf]
        %v615 = vld [vmem:[#allocation2 + $0x38] sm:$0xf]
        %v616 = vld [vmem:[#allocation2 + $0x3c] sm:$0xf]
        %v633 = vunpack.c.l.b16 %v601
        %v634 = vunpack.c.l.b16 %v602
        %v635 = vunpack.c.l.b16 %v603
        %v636 = vunpack.c.l.b16 %v604
        %v637 = vunpack.c.l.b16 %v605
        %v638 = vunpack.c.l.b16 %v606
        %v639 = vunpack.c.l.b16 %v607
        %v640 = vunpack.c.l.b16 %v608
        %v641 = vunpack.c.l.b16 %v609
        %v642 = vunpack.c.l.b16 %v610
        %v643 = vunpack.c.l.b16 %v611
        %v644 = vunpack.c.l.b16 %v612
        %v645 = vunpack.c.l.b16 %v613
        %v646 = vunpack.c.l.b16 %v614
        %v647 = vunpack.c.l.b16 %v615
        %v648 = vunpack.c.l.b16 %v616
        %v649 = vpack.c.b16 %v634, %v633
        %v650 = vpack.c.b16 %v636, %v635
        %v651 = vpack.c.b16 %v638, %v637
        %v652 = vpack.c.b16 %v640, %v639
        %v653 = vpack.c.b16 %v642, %v641
        %v654 = vpack.c.b16 %v644, %v643
        %v655 = vpack.c.b16 %v646, %v645
        %v656 = vpack.c.b16 %v648, %v647
        %665 = vmatprep.subr.bf16.mxu0 0
        %666 = vmatpush1.bf16.msra.mxu0 %v656
        %667 = vmatprep.subr.bf16.mxu0 0
        %668 = vmatpush1.bf16.msra.mxu0 %v655
        %669 = vmatprep.subr.bf16.mxu0 0
        %670 = vmatpush1.bf16.msra.mxu0 %v654
        %671 = vmatprep.subr.bf16.mxu0 0
        %672 = vmatpush1.bf16.msra.mxu0 %v653
        %673 = vmatprep.subr.bf16.mxu0 0
        %674 = vmatpush1.bf16.msra.mxu0 %v652
        %675 = vmatprep.subr.bf16.mxu0 0
        %676 = vmatpush1.bf16.msra.mxu0 %v651
        %677 = vmatprep.subr.bf16.mxu0 0
        %678 = vmatpush1.bf16.msra.mxu0 %v650
        %679 = vmatprep.subr.bf16.mxu0 0
        %680 = vmatpush1.bf16.msra.mxu0 %v649
        %681 = vmatprep.subr.bf16.mxu0 0
        %682 = vmatpush2.bf16.msra.mxu0 0
        %683 = vmatprep.subr.bf16.mxu0 0
        %684 = vmatpush2.bf16.msra.mxu0 0
        %685 = vmatprep.subr.bf16.mxu0 0
        %686 = vmatpush2.bf16.msra.mxu0 0
        %687 = vmatprep.subr.bf16.mxu0 0
        %688 = vmatpush2.bf16.msra.mxu0 0
        %689 = vmatprep.subr.bf16.mxu0 0
        %690 = vmatpush2.bf16.msra.mxu0 0
        %691 = vmatprep.subr.bf16.mxu0 0
        %692 = vmatpush2.bf16.msra.mxu0 0
        %693 = vmatprep.subr.bf16.mxu0 0
        %694 = vmatpush2.bf16.msra.mxu0 0
        %695 = vmatprep.subr.bf16.mxu0 0
        %696 = vmatpush2.bf16.msra.mxu0 0
        %697 = vmatprep.mubr.bf16.mxu0 0
        %698 = vmatmul.mubr.bf16.gmra.mxu0 %v600
        %v699 = vpop.f32.mrf.mxu0
        %v700 = vadd.f32 0.0, %v699
        %v701 = vpop.f32.mrf.mxu0
        %v702 = vpop.f32.mrf.mxu0
        %v703 = vpop.f32.mrf.mxu0
        %704 = vdwg.mxu0
        %v705 = vlaneseq
        %v706 = vshrl.u32 %v705, 7
        %v707 = vsub.s32 0, %v706
        %v708 = vrot.slane %v700, %v707
        %v709 = vadd.f32 %v598, %v708
        %v710 = vtanh.pop %v709
        %v711 = vld [vmem:[%s6] sm:$0x1]
        %v712 = vpack.c.bf16 %v710, %v710
        %713 = vmatprep.subr.bf16.mxu0 0
        %714 = vmatpush1.bf16.xpose.msra.mxu0 0
        %715 = vmatprep.subr.bf16.mxu0 0
        %716 = vmatpush1.bf16.xpose.msra.mxu0 0
        %717 = vmatprep.subr.bf16.mxu0 0
        %718 = vmatpush1.bf16.xpose.msra.mxu0 0
        %719 = vmatprep.subr.bf16.mxu0 0
        %720 = vmatpush1.bf16.xpose.msra.mxu0 0
        %721 = vmatprep.subr.bf16.mxu0 0
        %722 = vmatpush1.bf16.xpose.msra.mxu0 0
        %723 = vmatprep.subr.bf16.mxu0 0
        %724 = vmatpush1.bf16.xpose.msra.mxu0 0
        %725 = vmatprep.subr.bf16.mxu0 0
        %726 = vmatpush1.bf16.xpose.msra.mxu0 0
        %727 = vmatprep.subr.bf16.mxu0 0
        %728 = vmatpush1.bf16.xpose.msra.mxu0 %v712
        %729 = vmatprep.subr.bf16.mxu0 0
        %730 = vmatpush2.bf16.xpose.msra.mxu0 0
        %731 = vmatprep.subr.bf16.mxu0 0
        %732 = vmatpush2.bf16.xpose.msra.mxu0 0
        %733 = vmatprep.subr.bf16.mxu0 0
        %734 = vmatpush2.bf16.xpose.msra.mxu0 0
        %735 = vmatprep.subr.bf16.mxu0 0
        %736 = vmatpush2.bf16.xpose.msra.mxu0 0
        %737 = vmatprep.subr.bf16.mxu0 0
        %738 = vmatpush2.bf16.xpose.msra.mxu0 0
        %739 = vmatprep.subr.bf16.mxu0 0
        %740 = vmatpush2.bf16.xpose.msra.mxu0 0
        %741 = vmatprep.subr.bf16.mxu0 0
        %742 = vmatpush2.bf16.xpose.msra.mxu0 0
        %743 = vmatprep.subr.bf16.mxu0 0
        %744 = vmatpush2.bf16.xpose.msra.mxu0 0
        %745 = vmatprep.mubr.bf16.mxu0 0
        %746 = vmatmul.mubr.bf16.gmra.mxu0 %v711
        %v747 = vpop.f32.mrf.mxu0
        %v748 = vadd.f32 0.0, %v747
        %v749 = vpop.f32.mrf.mxu0
        %v750 = vpop.f32.mrf.mxu0
        %v751 = vpop.f32.mrf.mxu0
        %752 = vdwg.mxu0
        %vm753 = vcmp.eq.f32.partialorder %v599, 0.0
        %v754 = vsel %vm753, -1e+10, %v748
        %vm755 = vcmask 57344
        %v756 = vsel %vm755, %v754, -inf
        %757 = vmax.xlane.f32.xlu0 %v756
        %v758 = vpop.xlane.xlu0 %757
        %v759 = vsub.f32 %v754, %v758
        %v760 = vmul.f32 %v759, 1.442695
        %v761 = vpow.pop %v760
        %v762 = vsel %vm755, %v761, 0.0
        %763 = vadd.xlane.f32.xlu0 %v762
        %v764 = vpop.xlane.xlu0 %763
        %v765 = vrcp.pop %v764
        %v766 = vmul.f32 %v761, %v765
        %767 = vst.msk [vmem:[%s576] sm:$0x1] %vm755, %v766
        %vm768 = vcmask 64512
        %v770 = vsel %vm768, %v766, 0
        %772 = vmatprep.subr.mxu0 0.0
        %773 = vmatpush1.msra.mxu0 0.0
        %774 = vmatprep.subr.mxu0 0.0
        %775 = vmatpush1.msra.mxu0 0.0
        %776 = vmatprep.subr.mxu0 0.0
        %777 = vmatpush1.msra.mxu0 0.0
        %778 = vmatprep.subr.mxu0 0.0
        %779 = vmatpush1.msra.mxu0 0.0
        %780 = vmatprep.subr.mxu0 0.0
        %781 = vmatpush1.msra.mxu0 0.0
        %782 = vmatprep.subr.mxu0 0.0
        %783 = vmatpush1.msra.mxu0 0.0
        %784 = vmatprep.subr.mxu0 0.0
        %785 = vmatpush1.msra.mxu0 0.0
        %786 = vmatprep.subr.mxu0 0.0
        %787 = vmatpush1.msra.mxu0 0.0
        %788 = vmatprep.subr.mxu0 0.0
        %789 = vmatpush1.msra.mxu0 0.0
        %790 = vmatprep.subr.mxu0 0.0
        %791 = vmatpush1.msra.mxu0 0.0
        %792 = vmatprep.subr.mxu0 0.0
        %793 = vmatpush1.msra.mxu0 0.0
        %794 = vmatprep.subr.mxu0 0.0
        %795 = vmatpush1.msra.mxu0 0.0
        %796 = vmatprep.subr.mxu0 0.0
        %797 = vmatpush1.msra.mxu0 0.0
        %798 = vmatprep.subr.mxu0 0.0
        %799 = vmatpush1.msra.mxu0 0.0
        %800 = vmatprep.subr.mxu0 0.0
        %801 = vmatpush1.msra.mxu0 0.0
        %802 = vmatprep.subr.mxu0 0.0
        %803 = vmatpush1.msra.mxu0 %v597
        %804 = vmatprep.subr.mxu0 0.0
        %805 = vmatpush2.msra.mxu0 0.0
        %806 = vmatprep.subr.mxu0 0.0
        %807 = vmatpush2.msra.mxu0 0.0
        %808 = vmatprep.subr.mxu0 0.0
        %809 = vmatpush2.msra.mxu0 0.0
        %810 = vmatprep.subr.mxu0 0.0
        %811 = vmatpush2.msra.mxu0 0.0
        %812 = vmatprep.subr.mxu0 0.0
        %813 = vmatpush2.msra.mxu0 0.0
        %814 = vmatprep.subr.mxu0 0.0
        %815 = vmatpush2.msra.mxu0 0.0
        %816 = vmatprep.subr.mxu0 0.0
        %817 = vmatpush2.msra.mxu0 0.0
        %818 = vmatprep.subr.mxu0 0.0
        %819 = vmatpush2.msra.mxu0 0.0
        %820 = vmatprep.subr.mxu0 0.0
        %821 = vmatpush2.msra.mxu0 0.0
        %822 = vmatprep.subr.mxu0 0.0
        %823 = vmatpush2.msra.mxu0 0.0
        %824 = vmatprep.subr.mxu0 0.0
        %825 = vmatpush2.msra.mxu0 0.0
        %826 = vmatprep.subr.mxu0 0.0
        %827 = vmatpush2.msra.mxu0 0.0
        %828 = vmatprep.subr.mxu0 0.0
        %829 = vmatpush2.msra.mxu0 0.0
        %830 = vmatprep.subr.mxu0 0.0
        %831 = vmatpush2.msra.mxu0 0.0
        %832 = vmatprep.subr.mxu0 0.0
        %833 = vmatpush2.msra.mxu0 0.0
        %834 = vmatprep.subr.mxu0 0.0
        %835 = vmatpush2.msra.mxu0 0.0
        %836 = vmatprep.mubr.f32.mxu0 0.0
        %837 = vmatmul.mubr.f32.gmra.mxu0 %v770
        %v838 = vpop.f32.mrf.mxu0
        %v839 = vadd.f32 0.0, %v838
        %v840 = vpop.f32.mrf.mxu0
        %841 = vdwg.mxu0
        %843 = vrot.lane.b32.xlu0 %v839, 32
        %v844 = vpop.permute.xlu0 %843
        %vm846 = vcmask 261120
        %v847 = vsel %vm846, %v595, %v844
        %v848 = vpack.c.bf16 %v847, %v847
        %v849 = vld [vmem:[%s7] sm:$0xff]
        %v850 = vld [vmem:[%s7 + $0x8] sm:$0xf]
        %v851 = vld [vmem:[%s7 + $0xc] sm:$0xff]
        %v852 = vld [vmem:[%s7 + $0x14] sm:$0xf]
        %v853 = vld [vmem:[%s7 + $0x18] sm:$0xff]
        %v854 = vld [vmem:[%s7 + $0x20] sm:$0xf]
        %v855 = vld [vmem:[%s7 + $0x24] sm:$0xff]
        %v856 = vld [vmem:[%s7 + $0x2c] sm:$0xf]
        %v857 = vld [vmem:[%s7 + $0x30] sm:$0xff]
        %v858 = vld [vmem:[%s7 + $0x38] sm:$0xf]
        %v859 = vld [vmem:[%s7 + $0x3c] sm:$0xff]
        %v860 = vld [vmem:[%s7 + $0x44] sm:$0xf]
        %v861 = vld [vmem:[%s7 + $0x48] sm:$0xff]
        %v862 = vld [vmem:[%s7 + $0x50] sm:$0xf]
        %v863 = vld [vmem:[%s7 + $0x54] sm:$0xff]
        %v864 = vld [vmem:[%s7 + $0x5c] sm:$0xf]
        %v865 = vld [vmem:[%s7 + $0x60] sm:$0xff]
        %v866 = vld [vmem:[%s7 + $0x68] sm:$0xf]
        %v867 = vld [vmem:[%s7 + $0x6c] sm:$0xff]
        %v868 = vld [vmem:[%s7 + $0x74] sm:$0xf]
        %v869 = vld [vmem:[%s7 + $0x78] sm:$0xff]
        %v870 = vld [vmem:[%s7 + $0x80] sm:$0xf]
        %v871 = vld [vmem:[%s7 + $0x84] sm:$0xff]
        %v872 = vld [vmem:[%s7 + $0x8c] sm:$0xf]
        %v873 = vld [vmem:[%s9] sm:$0x7]
        %v898 = vunpack.c.l.b16 %v849
        %v899 = vunpack.c.h.b16 %v849
        %v900 = vunpack.c.l.b16 %v850
        %v901 = vunpack.c.l.b16 %v851
        %v902 = vunpack.c.h.b16 %v851
        %v903 = vunpack.c.l.b16 %v852
        %v904 = vunpack.c.l.b16 %v853
        %v905 = vunpack.c.h.b16 %v853
        %v906 = vunpack.c.l.b16 %v854
        %v907 = vunpack.c.l.b16 %v855
        %v908 = vunpack.c.h.b16 %v855
        %v909 = vunpack.c.l.b16 %v856
        %v910 = vunpack.c.l.b16 %v857
        %v911 = vunpack.c.h.b16 %v857
        %v912 = vunpack.c.l.b16 %v858
        %v913 = vunpack.c.l.b16 %v859
        %v914 = vunpack.c.h.b16 %v859
        %v915 = vunpack.c.l.b16 %v860
        %v916 = vunpack.c.l.b16 %v861
        %v917 = vunpack.c.h.b16 %v861
        %v918 = vunpack.c.l.b16 %v862
        %v919 = vunpack.c.l.b16 %v863
        %v920 = vunpack.c.h.b16 %v863
        %v921 = vunpack.c.l.b16 %v864
        %v922 = vunpack.c.l.b16 %v865
        %v923 = vunpack.c.h.b16 %v865
        %v924 = vunpack.c.l.b16 %v866
        %v925 = vunpack.c.l.b16 %v867
        %v926 = vunpack.c.h.b16 %v867
        %v927 = vunpack.c.l.b16 %v868
        %v928 = vunpack.c.l.b16 %v869
        %v929 = vunpack.c.h.b16 %v869
        %v930 = vunpack.c.l.b16 %v870
        %v931 = vunpack.c.l.b16 %v871
        %v932 = vunpack.c.h.b16 %v871
        %v933 = vunpack.c.l.b16 %v872
        %v934 = vpack.c.b16 %v901, %v898
        %v935 = vpack.c.b16 %v902, %v899
        %v936 = vpack.c.b16 %v903, %v900
        %v937 = vpack.c.b16 %v907, %v904
        %v938 = vpack.c.b16 %v908, %v905
        %v939 = vpack.c.b16 %v909, %v906
        %v940 = vpack.c.b16 %v913, %v910
        %v941 = vpack.c.b16 %v914, %v911
        %v942 = vpack.c.b16 %v915, %v912
        %v943 = vpack.c.b16 %v919, %v916
        %v944 = vpack.c.b16 %v920, %v917
        %v945 = vpack.c.b16 %v921, %v918
        %v946 = vpack.c.b16 %v925, %v922
        %v947 = vpack.c.b16 %v926, %v923
        %v948 = vpack.c.b16 %v927, %v924
        %v949 = vpack.c.b16 %v931, %v928
        %v950 = vpack.c.b16 %v932, %v929
        %v951 = vpack.c.b16 %v933, %v930
        %v971 = vlaneseq
        %v972 = vshrl.u32 %v971, 7
        %v973 = vsub.s32 0, %v972
        %v974 = vrot.slane %v873, %v973
        %v975 = vlaneseq
        %v976 = vshrl.u32 %v975, 7
        %v977 = vsub.s32 1, %v976
        %v978 = vrot.slane %v873, %v977
        %v979 = vlaneseq
        %v980 = vshrl.u32 %v979, 7
        %v981 = vsub.s32 2, %v980
        %v982 = vrot.slane %v873, %v981
        %vm986 = vcmask 785408
        %v988 = vsel %vm986, %v848, 0
        %990 = vmatprep.subr.bf16.mxu0 0
        %991 = vmatpush1.bf16.msra.mxu0 0
        %992 = vmatprep.subr.bf16.mxu0 0
        %993 = vmatpush1.bf16.msra.mxu0 0
        %994 = vmatprep.subr.bf16.mxu0 %v950
        %995 = vmatpush1.bf16.msra.mxu0 %v949
        %996 = vmatprep.subr.bf16.mxu0 %v947
        %997 = vmatpush1.bf16.msra.mxu0 %v946
        %998 = vmatprep.subr.bf16.mxu0 %v944
        %999 = vmatpush1.bf16.msra.mxu0 %v943
        %1000 = vmatprep.subr.bf16.mxu0 %v941
        %1001 = vmatpush1.bf16.msra.mxu0 %v940
        %1002 = vmatprep.subr.bf16.mxu0 %v938
        %1003 = vmatpush1.bf16.msra.mxu0 %v937
        %1004 = vmatprep.subr.bf16.mxu0 %v935
        %1005 = vmatpush1.bf16.msra.mxu0 %v934
        %1006 = vmatprep.subr.bf16.mxu0 0
        %1007 = vmatpush2.bf16.msra.mxu0 0
        %1008 = vmatprep.subr.bf16.mxu0 0
        %1009 = vmatpush2.bf16.msra.mxu0 0
        %1010 = vmatprep.subr.bf16.mxu0 0
        %1011 = vmatpush2.bf16.msra.mxu0 0
        %1012 = vmatprep.subr.bf16.mxu0 0
        %1013 = vmatpush2.bf16.msra.mxu0 0
        %1014 = vmatprep.subr.bf16.mxu0 0
        %1015 = vmatpush2.bf16.msra.mxu0 0
        %1016 = vmatprep.subr.bf16.mxu0 0
        %1017 = vmatpush2.bf16.msra.mxu0 0
        %1018 = vmatprep.subr.bf16.mxu0 0
        %1019 = vmatpush2.bf16.msra.mxu0 0
        %1020 = vmatprep.subr.bf16.mxu0 0
        %1021 = vmatpush2.bf16.msra.mxu0 0
        %1022 = vmatprep.mubr.bf16.mxu0 0
        %1023 = vmatmul.mubr.bf16.gmra.mxu0 %v988
        %v1024 = vpop.f32.mrf.mxu0
        %v1025 = vadd.f32 %v974, %v1024
        %v1026 = vpop.f32.mrf.mxu0
        %v1027 = vadd.f32 %v978, %v1026
        %v1028 = vpop.f32.mrf.mxu0
        %v1029 = vpop.f32.mrf.mxu0
        %1030 = vdwg.mxu0
        %1031 = vmatprep.subr.bf16.mxu0 0
        %1032 = vmatpush1.bf16.msra.mxu0 0
        %1033 = vmatprep.subr.bf16.mxu0 0
        %1034 = vmatpush1.bf16.msra.mxu0 0
        %1035 = vmatprep.subr.bf16.mxu0 0
        %1036 = vmatpush1.bf16.msra.mxu0 %v951
        %1037 = vmatprep.subr.bf16.mxu0 0
        %1038 = vmatpush1.bf16.msra.mxu0 %v948
        %1039 = vmatprep.subr.bf16.mxu0 0
        %1040 = vmatpush1.bf16.msra.mxu0 %v945
        %1041 = vmatprep.subr.bf16.mxu0 0
        %1042 = vmatpush1.bf16.msra.mxu0 %v942
        %1043 = vmatprep.subr.bf16.mxu0 0
        %1044 = vmatpush1.bf16.msra.mxu0 %v939
        %1045 = vmatprep.subr.bf16.mxu0 0
        %1046 = vmatpush1.bf16.msra.mxu0 %v936
        %1047 = vmatprep.subr.bf16.mxu0 0
        %1048 = vmatpush2.bf16.msra.mxu0 0
        %1049 = vmatprep.subr.bf16.mxu0 0
        %1050 = vmatpush2.bf16.msra.mxu0 0
        %1051 = vmatprep.subr.bf16.mxu0 0
        %1052 = vmatpush2.bf16.msra.mxu0 0
        %1053 = vmatprep.subr.bf16.mxu0 0
        %1054 = vmatpush2.bf16.msra.mxu0 0
        %1055 = vmatprep.subr.bf16.mxu0 0
        %1056 = vmatpush2.bf16.msra.mxu0 0
        %1057 = vmatprep.subr.bf16.mxu0 0
        %1058 = vmatpush2.bf16.msra.mxu0 0
        %1059 = vmatprep.subr.bf16.mxu0 0
        %1060 = vmatpush2.bf16.msra.mxu0 0
        %1061 = vmatprep.subr.bf16.mxu0 0
        %1062 = vmatpush2.bf16.msra.mxu0 0
        %1063 = vmatprep.mubr.bf16.mxu0 0
        %1064 = vmatmul.mubr.bf16.gmra.mxu0 %v988
        %v1065 = vpop.f32.mrf.mxu0
        %v1066 = vadd.f32 %v982, %v1065
        %v1067 = vpop.f32.mrf.mxu0
        %v1068 = vpop.f32.mrf.mxu0
        %v1069 = vpop.f32.mrf.mxu0
        %1070 = vdwg.mxu0
        %v1071 = vld [vmem:[#allocation5] sm:$0xff]
        %v1072 = vld [vmem:[#allocation5 + $0x8] sm:$0xf]
        %v1073 = vld [vmem:[#allocation5 + $0xc] sm:$0xff]
        %v1074 = vld [vmem:[#allocation5 + $0x14] sm:$0xf]
        %v1075 = vld [vmem:[#allocation5 + $0x18] sm:$0xff]
        %v1076 = vld [vmem:[#allocation5 + $0x20] sm:$0xf]
        %v1077 = vld [vmem:[#allocation5 + $0x24] sm:$0xff]
        %v1078 = vld [vmem:[#allocation5 + $0x2c] sm:$0xf]
        %v1079 = vld [vmem:[#allocation5 + $0x30] sm:$0xff]
        %v1080 = vld [vmem:[#allocation5 + $0x38] sm:$0xf]
        %v1081 = vld [vmem:[#allocation5 + $0x3c] sm:$0xff]
        %v1082 = vld [vmem:[#allocation5 + $0x44] sm:$0xf]
        %v1083 = vld [vmem:[#allocation5 + $0x48] sm:$0xff]
        %v1084 = vld [vmem:[#allocation5 + $0x50] sm:$0xf]
        %v1085 = vld [vmem:[#allocation5 + $0x54] sm:$0xff]
        %v1086 = vld [vmem:[#allocation5 + $0x5c] sm:$0xf]
        %v1087 = vld [vmem:[#allocation5 + $0x60] sm:$0xff]
        %v1088 = vld [vmem:[#allocation5 + $0x68] sm:$0xf]
        %v1089 = vld [vmem:[#allocation5 + $0x6c] sm:$0xff]
        %v1090 = vld [vmem:[#allocation5 + $0x74] sm:$0xf]
        %v1091 = vld [vmem:[#allocation5 + $0x78] sm:$0xff]
        %v1092 = vld [vmem:[#allocation5 + $0x80] sm:$0xf]
        %v1093 = vld [vmem:[#allocation5 + $0x84] sm:$0xff]
        %v1094 = vld [vmem:[#allocation5 + $0x8c] sm:$0xf]
        %v1095 = vld [vmem:[#allocation5 + $0x90] sm:$0xff]
        %v1096 = vld [vmem:[#allocation5 + $0x98] sm:$0xf]
        %v1097 = vld [vmem:[#allocation5 + $0x9c] sm:$0xff]
        %v1098 = vld [vmem:[#allocation5 + $0xa4] sm:$0xf]
        %v1099 = vld [vmem:[#allocation5 + $0xa8] sm:$0xff]
        %v1100 = vld [vmem:[#allocation5 + $0xb0] sm:$0xf]
        %v1101 = vld [vmem:[#allocation5 + $0xb4] sm:$0xff]
        %v1102 = vld [vmem:[#allocation5 + $0xbc] sm:$0xf]
        %v1135 = vunpack.c.l.b16 %v1071
        %v1136 = vunpack.c.h.b16 %v1071
        %v1137 = vunpack.c.l.b16 %v1072
        %v1138 = vunpack.c.l.b16 %v1073
        %v1139 = vunpack.c.h.b16 %v1073
        %v1140 = vunpack.c.l.b16 %v1074
        %v1141 = vunpack.c.l.b16 %v1075
        %v1142 = vunpack.c.h.b16 %v1075
        %v1143 = vunpack.c.l.b16 %v1076
        %v1144 = vunpack.c.l.b16 %v1077
        %v1145 = vunpack.c.h.b16 %v1077
        %v1146 = vunpack.c.l.b16 %v1078
        %v1147 = vunpack.c.l.b16 %v1079
        %v1148 = vunpack.c.h.b16 %v1079
        %v1149 = vunpack.c.l.b16 %v1080
        %v1150 = vunpack.c.l.b16 %v1081
        %v1151 = vunpack.c.h.b16 %v1081
        %v1152 = vunpack.c.l.b16 %v1082
        %v1153 = vunpack.c.l.b16 %v1083
        %v1154 = vunpack.c.h.b16 %v1083
        %v1155 = vunpack.c.l.b16 %v1084
        %v1156 = vunpack.c.l.b16 %v1085
        %v1157 = vunpack.c.h.b16 %v1085
        %v1158 = vunpack.c.l.b16 %v1086
        %v1159 = vunpack.c.l.b16 %v1087
        %v1160 = vunpack.c.h.b16 %v1087
        %v1161 = vunpack.c.l.b16 %v1088
        %v1162 = vunpack.c.l.b16 %v1089
        %v1163 = vunpack.c.h.b16 %v1089
        %v1164 = vunpack.c.l.b16 %v1090
        %v1165 = vunpack.c.l.b16 %v1091
        %v1166 = vunpack.c.h.b16 %v1091
        %v1167 = vunpack.c.l.b16 %v1092
        %v1168 = vunpack.c.l.b16 %v1093
        %v1169 = vunpack.c.h.b16 %v1093
        %v1170 = vunpack.c.l.b16 %v1094
        %v1171 = vunpack.c.l.b16 %v1095
        %v1172 = vunpack.c.h.b16 %v1095
        %v1173 = vunpack.c.l.b16 %v1096
        %v1174 = vunpack.c.l.b16 %v1097
        %v1175 = vunpack.c.h.b16 %v1097
        %v1176 = vunpack.c.l.b16 %v1098
        %v1177 = vunpack.c.l.b16 %v1099
        %v1178 = vunpack.c.h.b16 %v1099
        %v1179 = vunpack.c.l.b16 %v1100
        %v1180 = vunpack.c.l.b16 %v1101
        %v1181 = vunpack.c.h.b16 %v1101
        %v1182 = vunpack.c.l.b16 %v1102
        %v1183 = vpack.c.b16 %v1138, %v1135
        %v1184 = vpack.c.b16 %v1139, %v1136
        %v1185 = vpack.c.b16 %v1140, %v1137
        %v1186 = vpack.c.b16 %v1144, %v1141
        %v1187 = vpack.c.b16 %v1145, %v1142
        %v1188 = vpack.c.b16 %v1146, %v1143
        %v1189 = vpack.c.b16 %v1150, %v1147
        %v1190 = vpack.c.b16 %v1151, %v1148
        %v1191 = vpack.c.b16 %v1152, %v1149
        %v1192 = vpack.c.b16 %v1156, %v1153
        %v1193 = vpack.c.b16 %v1157, %v1154
        %v1194 = vpack.c.b16 %v1158, %v1155
        %v1195 = vpack.c.b16 %v1162, %v1159
        %v1196 = vpack.c.b16 %v1163, %v1160
        %v1197 = vpack.c.b16 %v1164, %v1161
        %v1198 = vpack.c.b16 %v1168, %v1165
        %v1199 = vpack.c.b16 %v1169, %v1166
        %v1200 = vpack.c.b16 %v1170, %v1167
        %v1201 = vpack.c.b16 %v1174, %v1171
        %v1202 = vpack.c.b16 %v1175, %v1172
        %v1203 = vpack.c.b16 %v1176, %v1173
        %v1204 = vpack.c.b16 %v1180, %v1177
        %v1205 = vpack.c.b16 %v1181, %v1178
        %v1206 = vpack.c.b16 %v1182, %v1179
        %1231 = vmatprep.subr.bf16.mxu0 %v1205
        %1232 = vmatpush1.bf16.msra.mxu0 %v1204
        %1233 = vmatprep.subr.bf16.mxu0 %v1202
        %1234 = vmatpush1.bf16.msra.mxu0 %v1201
        %1235 = vmatprep.subr.bf16.mxu0 %v1199
        %1236 = vmatpush1.bf16.msra.mxu0 %v1198
        %1237 = vmatprep.subr.bf16.mxu0 %v1196
        %1238 = vmatpush1.bf16.msra.mxu0 %v1195
        %1239 = vmatprep.subr.bf16.mxu0 %v1193
        %1240 = vmatpush1.bf16.msra.mxu0 %v1192
        %1241 = vmatprep.subr.bf16.mxu0 %v1190
        %1242 = vmatpush1.bf16.msra.mxu0 %v1189
        %1243 = vmatprep.subr.bf16.mxu0 %v1187
        %1244 = vmatpush1.bf16.msra.mxu0 %v1186
        %1245 = vmatprep.subr.bf16.mxu0 %v1184
        %1246 = vmatpush1.bf16.msra.mxu0 %v1183
        %1247 = vmatprep.subr.bf16.mxu0 0
        %1248 = vmatpush2.bf16.msra.mxu0 0
        %1249 = vmatprep.subr.bf16.mxu0 0
        %1250 = vmatpush2.bf16.msra.mxu0 0
        %1251 = vmatprep.subr.bf16.mxu0 0
        %1252 = vmatpush2.bf16.msra.mxu0 0
        %1253 = vmatprep.subr.bf16.mxu0 0
        %1254 = vmatpush2.bf16.msra.mxu0 0
        %1255 = vmatprep.subr.bf16.mxu0 0
        %1256 = vmatpush2.bf16.msra.mxu0 0
        %1257 = vmatprep.subr.bf16.mxu0 0
        %1258 = vmatpush2.bf16.msra.mxu0 0
        %1259 = vmatprep.subr.bf16.mxu0 0
        %1260 = vmatpush2.bf16.msra.mxu0 0
        %1261 = vmatprep.subr.bf16.mxu0 0
        %1262 = vmatpush2.bf16.msra.mxu0 0
        %1263 = vmatprep.mubr.bf16.mxu0 0
        %1264 = vmatmul.mubr.bf16.gmra.mxu0 %v600
        %v1265 = vpop.f32.mrf.mxu0
        %v1266 = vadd.f32 0.0, %v1265
        %v1267 = vpop.f32.mrf.mxu0
        %v1268 = vadd.f32 0.0, %v1267
        %v1269 = vpop.f32.mrf.mxu0
        %v1270 = vpop.f32.mrf.mxu0
        %1271 = vdwg.mxu0
        %1272 = vmatprep.subr.bf16.mxu0 0
        %1273 = vmatpush1.bf16.msra.mxu0 %v1206
        %1274 = vmatprep.subr.bf16.mxu0 0
        %1275 = vmatpush1.bf16.msra.mxu0 %v1203
        %1276 = vmatprep.subr.bf16.mxu0 0
        %1277 = vmatpush1.bf16.msra.mxu0 %v1200
        %1278 = vmatprep.subr.bf16.mxu0 0
        %1279 = vmatpush1.bf16.msra.mxu0 %v1197
        %1280 = vmatprep.subr.bf16.mxu0 0
        %1281 = vmatpush1.bf16.msra.mxu0 %v1194
        %1282 = vmatprep.subr.bf16.mxu0 0
        %1283 = vmatpush1.bf16.msra.mxu0 %v1191
        %1284 = vmatprep.subr.bf16.mxu0 0
        %1285 = vmatpush1.bf16.msra.mxu0 %v1188
        %1286 = vmatprep.subr.bf16.mxu0 0
        %1287 = vmatpush1.bf16.msra.mxu0 %v1185
        %1288 = vmatprep.subr.bf16.mxu0 0
        %1289 = vmatpush2.bf16.msra.mxu0 0
        %1290 = vmatprep.subr.bf16.mxu0 0
        %1291 = vmatpush2.bf16.msra.mxu0 0
        %1292 = vmatprep.subr.bf16.mxu0 0
        %1293 = vmatpush2.bf16.msra.mxu0 0
        %1294 = vmatprep.subr.bf16.mxu0 0
        %1295 = vmatpush2.bf16.msra.mxu0 0
        %1296 = vmatprep.subr.bf16.mxu0 0
        %1297 = vmatpush2.bf16.msra.mxu0 0
        %1298 = vmatprep.subr.bf16.mxu0 0
        %1299 = vmatpush2.bf16.msra.mxu0 0
        %1300 = vmatprep.subr.bf16.mxu0 0
        %1301 = vmatpush2.bf16.msra.mxu0 0
        %1302 = vmatprep.subr.bf16.mxu0 0
        %1303 = vmatpush2.bf16.msra.mxu0 0
        %1304 = vmatprep.mubr.bf16.mxu0 0
        %1305 = vmatmul.mubr.bf16.gmra.mxu0 %v600
        %v1306 = vpop.f32.mrf.mxu0
        %v1307 = vadd.f32 0.0, %v1306
        %v1308 = vpop.f32.mrf.mxu0
        %v1309 = vpop.f32.mrf.mxu0
        %v1310 = vpop.f32.mrf.mxu0
        %1311 = vdwg.mxu0
        %v1312 = vadd.f32 %v1025, %v1266
        %v1313 = vxor.u32 %v1312, 2147483648
        %v1314 = vmul.f32 %v1313, 1.442695
        %v1315 = vpow.pop %v1314
        %v1316 = vadd.f32 %v1315, 1.0
        %v1317 = vrcp.pop %v1316
        %v1318 = vmul.f32 1.0, %v1317
        %v1319 = vadd.f32 %v1027, %v1268
        %v1320 = vxor.u32 %v1319, 2147483648
        %v1321 = vmul.f32 %v1320, 1.442695
        %v1322 = vpow.pop %v1321
        %v1323 = vadd.f32 %v1322, 1.0
        %v1324 = vrcp.pop %v1323
        %v1325 = vmul.f32 1.0, %v1324
        %v1326 = vld [vmem:[%s10] sm:$0x1]
        %v1327 = vadd.f32 %v1307, %v1326
        %v1328 = vmul.f32 %v1318, %v1327
        %v1329 = vadd.f32 %v1066, %v1328
        %v1330 = vtanh.pop %v1329
        %v1331 = vsub.f32 1.0, %v1325
        %v1332 = vmul.f32 %v1331, %v1330
        %v1333 = vmul.f32 %v1325, %v596
        %v1334 = vadd.f32 %v1332, %v1333
        %1335 = vst [vmem:[%s570] sm:$0x1] %v1334
        %v1337 = vlaneseq
        %v1338 = vshrl.u32 %v1337, 7
        %v1339 = vsub.s32 0, %v1338
        %v1340 = vrot.slane %v595, %v1339
        %1341 = vrot.lane.b32.xlu0 %v1340, 64
        %v1342 = vpop.permute.xlu0 %1341
        %vm1344 = vcmask 523264
        %v1345 = vsel %vm1344, %v839, %v1342
        %v1346 = vpack.c.bf16 %v1334, %v1334
        %v1347 = vpack.c.bf16 %v1345, %v1345
        %v1348 = vld [vmem:[%s11] sm:$0xf]
        %v1349 = vld [vmem:[%s11 + $0x4] sm:$0xf]
        %v1350 = vld [vmem:[%s11 + $0x8] sm:$0xf]
        %v1351 = vld [vmem:[%s11 + $0xc] sm:$0xf]
        %v1352 = vld [vmem:[%s11 + $0x10] sm:$0xf]
        %v1353 = vld [vmem:[%s11 + $0x14] sm:$0xf]
        %v1354 = vld [vmem:[%s11 + $0x18] sm:$0xf]
        %v1355 = vld [vmem:[%s11 + $0x1c] sm:$0xf]
        %v1356 = vld [vmem:[%s11 + $0x20] sm:$0xf]
        %v1357 = vld [vmem:[%s11 + $0x24] sm:$0xf]
        %v1358 = vld [vmem:[%s11 + $0x28] sm:$0xf]
        %v1359 = vld [vmem:[%s11 + $0x2c] sm:$0xf]
        %v1360 = vld [vmem:[%s11 + $0x30] sm:$0xf]
        %v1361 = vld [vmem:[%s11 + $0x34] sm:$0xf]
        %v1362 = vld [vmem:[%s11 + $0x38] sm:$0xf]
        %v1363 = vld [vmem:[%s11 + $0x3c] sm:$0xf]
        %v1364 = vld [vmem:[%s11 + $0x40] sm:$0xf]
        %v1365 = vld [vmem:[%s11 + $0x44] sm:$0xf]
        %v1366 = vld [vmem:[%s11 + $0x48] sm:$0xf]
        %v1367 = vld [vmem:[%s11 + $0x4c] sm:$0xf]
        %v1368 = vld [vmem:[%s11 + $0x50] sm:$0xf]
        %v1369 = vld [vmem:[%s11 + $0x54] sm:$0xf]
        %v1370 = vld [vmem:[%s11 + $0x58] sm:$0xf]
        %v1371 = vld [vmem:[%s11 + $0x5c] sm:$0xf]
        %v1372 = vld [vmem:[%s11 + $0x60] sm:$0xf]
        %v1373 = vld [vmem:[%s11 + $0x64] sm:$0xf]
        %v1374 = vld [vmem:[%s11 + $0x68] sm:$0xf]
        %v1375 = vld [vmem:[%s11 + $0x6c] sm:$0xf]
        %v1376 = vld [vmem:[%s12] sm:$0x1]
        %v1405 = vunpack.c.l.b16 %v1348
        %v1406 = vunpack.c.l.b16 %v1349
        %v1407 = vunpack.c.l.b16 %v1350
        %v1408 = vunpack.c.l.b16 %v1351
        %v1409 = vunpack.c.l.b16 %v1352
        %v1410 = vunpack.c.l.b16 %v1353
        %v1411 = vunpack.c.l.b16 %v1354
        %v1412 = vunpack.c.l.b16 %v1355
        %v1413 = vunpack.c.l.b16 %v1356
        %v1414 = vunpack.c.l.b16 %v1357
        %v1415 = vunpack.c.l.b16 %v1358
        %v1416 = vunpack.c.l.b16 %v1359
        %v1417 = vunpack.c.l.b16 %v1360
        %v1418 = vunpack.c.l.b16 %v1361
        %v1419 = vunpack.c.l.b16 %v1362
        %v1420 = vunpack.c.l.b16 %v1363
        %v1421 = vunpack.c.l.b16 %v1364
        %v1422 = vunpack.c.l.b16 %v1365
        %v1423 = vunpack.c.l.b16 %v1366
        %v1424 = vunpack.c.l.b16 %v1367
        %v1425 = vunpack.c.l.b16 %v1368
        %v1426 = vunpack.c.l.b16 %v1369
        %v1427 = vunpack.c.l.b16 %v1370
        %v1428 = vunpack.c.l.b16 %v1371
        %v1429 = vunpack.c.l.b16 %v1372
        %v1430 = vunpack.c.l.b16 %v1373
        %v1431 = vunpack.c.l.b16 %v1374
        %v1432 = vunpack.c.l.b16 %v1375
        %v1433 = vpack.c.b16 %v1406, %v1405
        %v1434 = vpack.c.b16 %v1408, %v1407
        %v1435 = vpack.c.b16 %v1410, %v1409
        %v1436 = vpack.c.b16 %v1412, %v1411
        %v1437 = vpack.c.b16 %v1414, %v1413
        %v1438 = vpack.c.b16 %v1416, %v1415
        %v1439 = vpack.c.b16 %v1418, %v1417
        %v1440 = vpack.c.b16 %v1420, %v1419
        %v1441 = vpack.c.b16 %v1422, %v1421
        %v1442 = vpack.c.b16 %v1424, %v1423
        %v1443 = vpack.c.b16 %v1426, %v1425
        %v1444 = vpack.c.b16 %v1428, %v1427
        %v1445 = vpack.c.b16 %v1430, %v1429
        %v1446 = vpack.c.b16 %v1432, %v1431
        %v1462 = vsel %vm986, %v1347, 0
        %1464 = vmatprep.subr.bf16.mxu0 0
        %1465 = vmatpush1.bf16.msra.mxu0 %v1440
        %1466 = vmatprep.subr.bf16.mxu0 0
        %1467 = vmatpush1.bf16.msra.mxu0 %v1439
        %1468 = vmatprep.subr.bf16.mxu0 0
        %1469 = vmatpush1.bf16.msra.mxu0 %v1438
        %1470 = vmatprep.subr.bf16.mxu0 0
        %1471 = vmatpush1.bf16.msra.mxu0 %v1437
        %1472 = vmatprep.subr.bf16.mxu0 0
        %1473 = vmatpush1.bf16.msra.mxu0 %v1436
        %1474 = vmatprep.subr.bf16.mxu0 0
        %1475 = vmatpush1.bf16.msra.mxu0 %v1435
        %1476 = vmatprep.subr.bf16.mxu0 0
        %1477 = vmatpush1.bf16.msra.mxu0 %v1434
        %1478 = vmatprep.subr.bf16.mxu0 0
        %1479 = vmatpush1.bf16.msra.mxu0 %v1433
        %1480 = vmatprep.subr.bf16.mxu0 0
        %1481 = vmatpush2.bf16.msra.mxu0 0
        %1482 = vmatprep.subr.bf16.mxu0 0
        %1483 = vmatpush2.bf16.msra.mxu0 0
        %1484 = vmatprep.subr.bf16.mxu0 0
        %1485 = vmatpush2.bf16.msra.mxu0 %v1446
        %1486 = vmatprep.subr.bf16.mxu0 0
        %1487 = vmatpush2.bf16.msra.mxu0 %v1445
        %1488 = vmatprep.subr.bf16.mxu0 0
        %1489 = vmatpush2.bf16.msra.mxu0 %v1444
        %1490 = vmatprep.subr.bf16.mxu0 0
        %1491 = vmatpush2.bf16.msra.mxu0 %v1443
        %1492 = vmatprep.subr.bf16.mxu0 0
        %1493 = vmatpush2.bf16.msra.mxu0 %v1442
        %1494 = vmatprep.subr.bf16.mxu0 0
        %1495 = vmatpush2.bf16.msra.mxu0 %v1441
        %1496 = vmatprep.mubr.bf16.mxu0 %v1462
        %1497 = vmatmul.mubr.bf16.gmra.mxu0 %v1346
        %v1498 = vpop.f32.mrf.mxu0
        %v1499 = vadd.f32 %v1376, %v1498
        %v1500 = vpop.f32.mrf.mxu0
        %v1501 = vpop.f32.mrf.mxu0
        %v1502 = vpop.f32.mrf.mxu0
        %1503 = vdwg.mxu0
        %vm1504 = vcmask 516096
        %1505 = vst.msk [vmem:[%s564] sm:$0x1] %vm1504, %v1499
        %s1506 = sand.u32 %s341, 1
        %s1507 = scalar_lea.sflag [#allocation4], %s1506
        %s1508 = sand.u32 %s341, 1
        %s1509 = scalar_lea.vmem [#allocation7], %s1508
        %s1510 = sand.u32 %s35, 1
        %s1511 = scalar_lea.sflag [#allocation9], %s1510
        %s1512 = sand.u32 %s367, 1
        %s1513 = scalar_lea.vmem [#allocation8], %s1512
        %s1514 = sand.u32 %s35, 1
        %s1515 = scalar_lea.sflag [#allocation9], %s1514
        %s1516 = sand.u32 %s393, 1
        %s1517 = scalar_lea.vmem [#allocation10], %s1516
        // Predicated region
        $region81: #{tpu_custom_call.1} parent=71 // pred_check
          %p1518 = pneg %p351
        $region82: #{tpu_custom_call.1} parent=71 // pred_check_branch
          %1520 = sbr.rel (%p1518) target = $region84
        $region83: #{tpu_custom_call.1} parent=71 // pred_region
          %s1522 = ssub.s32 16, 16
          %1523 = vsyncadd %s1507, %s1522
          %s1524 = smul.addr %s35, 16
          %s1525 = scalar_lea.hbm %s13, %s1524
          %s1527 = sshll.u32 %s1509, 4
          %s1528 = int_to_ptr.vmem [resolvable:$true] %s1527
          %1530 = dma.vmem_to_hbm [thread:$0]  %s1528, 16, %s1525, %s1507
        $region84: #{tpu_custom_call.1} parent=71 // pred_fallthru
          _
        // Predicated region
        $region85: #{tpu_custom_call.1} parent=71 // pred_check
          %p1531 = pneg %p377
        $region86: #{tpu_custom_call.1} parent=71 // pred_check_branch
          %1533 = sbr.rel (%p1531) target = $region88
        $region87: #{tpu_custom_call.1} parent=71 // pred_region
          %s1535 = ssub.s32 16, 16
          %1536 = vsyncadd %s1511, %s1535
          %s1537 = smul.addr %s35, 16
          %s1538 = scalar_lea.hbm %s14, %s1537
          %s1540 = sshll.u32 %s1513, 4
          %s1541 = int_to_ptr.vmem [resolvable:$true] %s1540
          %1543 = dma.vmem_to_hbm [thread:$0]  %s1541, 16, %s1538, %s1511
        $region88: #{tpu_custom_call.1} parent=71 // pred_fallthru
          _
        // Predicated region
        $region89: #{tpu_custom_call.1} parent=71 // pred_check
          %p1544 = pneg %p403
        $region90: #{tpu_custom_call.1} parent=71 // pred_check_branch
          %1546 = sbr.rel (%p1544) target = $region92
        $region91: #{tpu_custom_call.1} parent=71 // pred_region
          %s1548 = ssub.s32 16, 16
          %1549 = vsyncadd %s1515, %s1548
          %s1550 = smul.addr %s35, 16
          %s1551 = scalar_lea.hbm %s15, %s1550
          %s1553 = sshll.u32 %s1517, 4
          %s1554 = int_to_ptr.vmem [resolvable:$true] %s1553
          %1556 = dma.vmem_to_hbm [thread:$0]  %s1554, 16, %s1551, %s1515
        $region92: #{tpu_custom_call.1} parent=71 // pred_fallthru
          _
      $region72: #{tpu_custom_call.1} parent=5 // pred_fallthru
        _
      %p1557 = scmp.le.s32.totalorder 2, %s30
      // Predicated region
      $region93: #{tpu_custom_call.1} parent=5 // pred_check
        %p1558 = pneg %p1557
      $region94: #{tpu_custom_call.1} parent=5 // pred_check_branch
        %1560 = sbr.rel (%p1558) target = $region96
      $region95: #{tpu_custom_call.1} parent=5 // pred_region
        %s1561 = ssub.s32 %s30, 2
        // Predicated region
        $region97: #{tpu_custom_call.1} parent=95 // pred_check
          %p1562 = pneg %p357
        $region98: #{tpu_custom_call.1} parent=95 // pred_check_branch
          %1564 = sbr.rel (%p1562) target = $region100
        $region99: #{tpu_custom_call.1} parent=95 // pred_region
          %s1565 = sand.u32 %s342, 1
          %s1566 = scalar_lea.sflag [#allocation4], %s1565
          %s1567 = sand.u32 %s342, 1
          %s1568 = scalar_lea.vmem [#allocation7], %s1567
          %1569 = dma.done %s1566, 16
        $region100: #{tpu_custom_call.1} parent=95 // pred_fallthru
          _
        // Predicated region
        $region101: #{tpu_custom_call.1} parent=95 // pred_check
          %p1570 = pneg %p383
        $region102: #{tpu_custom_call.1} parent=95 // pred_check_branch
          %1572 = sbr.rel (%p1570) target = $region104
        $region103: #{tpu_custom_call.1} parent=95 // pred_region
          %s1573 = sand.u32 %s36, 1
          %s1574 = scalar_lea.sflag [#allocation9], %s1573
          %s1575 = sand.u32 %s368, 1
          %s1576 = scalar_lea.vmem [#allocation8], %s1575
          %1577 = dma.done %s1574, 16
        $region104: #{tpu_custom_call.1} parent=95 // pred_fallthru
          _
        // Predicated region
        $region105: #{tpu_custom_call.1} parent=95 // pred_check
          %p1578 = pneg %p409
        $region106: #{tpu_custom_call.1} parent=95 // pred_check_branch
          %1580 = sbr.rel (%p1578) target = $region108
        $region107: #{tpu_custom_call.1} parent=95 // pred_region
          %s1581 = sand.u32 %s36, 1
          %s1582 = scalar_lea.sflag [#allocation9], %s1581
          %s1583 = sand.u32 %s394, 1
          %s1584 = scalar_lea.vmem [#allocation10], %s1583
          %1585 = dma.done %s1582, 16
        $region108: #{tpu_custom_call.1} parent=95 // pred_fallthru
          _
      $region96: #{tpu_custom_call.1} parent=5 // pred_fallthru
        _
    $region6: #{tpu_custom_call.1} parent=1 // loop_footer
      %s34 = sadd.s32 1, %s30
    $region7: #{tpu_custom_call.1} parent=1 // loop_footer_branch
      %29 = sbr.rel target = $region3
    $region8: #{tpu_custom_call.1} parent=1 // loop_exit
      _
    %1586 = vsyncpa [#allocation3], 1
    %s1587 = scalar_lea.sflag [#allocation3], 1
    %1588 = vsyncpa %s1587, 1
    %1589 = vsyncpa [#allocation6], 1
    %1590 = vsyncpa [#allocation4], 1
    %s1591 = scalar_lea.sflag [#allocation4], 1
    %1592 = vsyncpa %s1591, 1
    %1593 = vsyncpa [#allocation9], 1
    %s1594 = scalar_lea.sflag [#allocation9], 1
    %1595 = vsyncpa %s1594, 1

</llo_original>
